<compile_context>
chip_gen: v6e
topology: v6e:2x2x1
jax: 0.10.0
libtpu: 0.0.40
codegen_flags: <defaults>
</compile_context>

<pallas_src>
import functools

import numpy as np
import jax
import jax.numpy as jnp
from jax.experimental import pallas as pl
from jax.experimental.pallas import tpu as pltpu

# Module hyper-parameters (small synthetic configuration of the nn.Module).
FEAT_DIM = 32           # feat_dim
NUM_GRID = 7            # num_grid
QUEUE_LEN = 512         # queue_len (kept small for the demo)
TEMPERATURE = 0.3
CONF_THRESH = 0.2


# --------------------------------------------------------------------------
# Host-side constant: adaptive-average-pooling cell matrix (matches PyTorch's
# F.adaptive_avg_pool2d bin boundaries, including uneven bins).
# --------------------------------------------------------------------------
def _adaptive_pool_matrix_1d(in_size: int, out_size: int) -> np.ndarray:
    """Row-stochastic (out_size, in_size) matrix: y = M @ x == adaptive_avg_pool1d."""
    starts = (np.arange(out_size) * in_size) // out_size
    ends = -((-(np.arange(1, out_size + 1) * in_size)) // out_size)   # ceil div
    idx = np.arange(in_size)
    ind = (idx[None, :] >= starts[:, None]) & (idx[None, :] < ends[:, None])
    return ind.astype(np.float32) / (ends - starts)[:, None].astype(np.float32)


def _build_pool_cell_t(h: int, w: int, num_grid: int) -> np.ndarray:
    """(H*W, G*G) matrix so that pooled(C, G*G) = x(C, H*W) @ P reproduces
    F.adaptive_avg_pool2d; column order gi*G + gj matches the
    permute(0,2,3,1).contiguous().view(-1, C) cell order."""
    ph = _adaptive_pool_matrix_1d(h, num_grid)        # (G, H)
    pw = _adaptive_pool_matrix_1d(w, num_grid)        # (G, W)
    return np.ascontiguousarray(np.kron(ph, pw).T)    # (H*W, G*G)


# --------------------------------------------------------------------------
# Fused kernel: confidence weighting + adaptive pooling (one bf16 MXU matmul)
# + masks + rsqrt normalization + positive logit + strip-wise online
# logsumexp over the queue + masked-mean cross entropy.
# Layout convention inside the kernel: features on sublanes, cells on lanes.
# --------------------------------------------------------------------------
def _cdc_loss_kernel(anc_ref, pos_ref, conf_ref, pcell_ref, queue_ref, out_ref,
                     *, batch, channels, temperature, conf_thresh, k_strip):
    hw = pcell_ref.shape[0]
    c = channels
    k_total = queue_ref.shape[0]
    inv_t = 1.0 / temperature

    pcell_f32 = pcell_ref[...]                       # (HW, GG) f32
    pcell_bf16 = pcell_f32.astype(jnp.bfloat16)

    # Confidence-weighted anchor/positive pixels of every batch, stacked along
    # sublanes -> ONE fused bf16 pooling matmul (f32 accumulation).
    conf_rows = []
    parts = []
    for b in range(batch):
        cb = conf_ref[pl.ds(b, 1), :]                                # (1, HW)
        conf_rows.append(cb)
        parts.append(anc_ref[pl.ds(b * c, c), :] * cb)               # (C, HW)
        parts.append(pos_ref[pl.ds(b * c, c), :] * cb)               # (C, HW)
    lhs = jnp.concatenate(parts, axis=0).astype(jnp.bfloat16)        # (B*2C, HW)
    pooled = jnp.dot(lhs, pcell_bf16,
                     preferred_element_type=jnp.float32)             # (B*2C, GG)

    num = jnp.zeros((1, 1), jnp.float32)
    den = jnp.zeros((1, 1), jnp.float32)

    for b in range(batch):
        pa = pooled[2 * c * b: 2 * c * b + c, :]                     # (C, GG)
        pp = pooled[2 * c * b + c: 2 * c * (b + 1), :]               # (C, GG)

        # Pooled confidence kept in f32 so the >= threshold mask matches the
        # f32 reference exactly (bf16 rounding could flip borderline cells).
        cb8 = jnp.broadcast_to(conf_rows[b], (8, hw))                # tile-high lhs
        pc = jnp.dot(cb8, pcell_f32,
                     preferred_element_type=jnp.float32)[0:1, :]     # (1, GG)

        # Validity mask on the sums of squares (== "norm != 0" semantics).
        ss_a = jnp.sum(pa * pa, axis=0, keepdims=True)               # (1, GG)
        ss_p = jnp.sum(pp * pp, axis=0, keepdims=True)
        mask = ((ss_a > 0.0) & (ss_p > 0.0) &
                (pc >= conf_thresh)).astype(jnp.float32)             # (1, GG)

        # rsqrt normalization (EUP); fold 1/temperature into the anchor so the
        # queue logits need no extra (strip, GG) multiply.
        inv_a = jax.lax.rsqrt(jnp.where(ss_a > 0.0, ss_a, 1.0))
        inv_p = jax.lax.rsqrt(jnp.where(ss_p > 0.0, ss_p, 1.0))
        a_sc = pa * (inv_a * inv_t)                                  # (C, GG)
        p_hat = pp * inv_p                                           # (C, GG)

        l_pos = jnp.sum(a_sc * p_hat, axis=0, keepdims=True)         # (1, GG), /T
        a_bf = a_sc.astype(jnp.bfloat16)                             # MXU operand

        # Online logsumexp over the queue, one strip of k_strip entries at a
        # time (never materializes the full (K, GG) logits).
        m = l_pos
        s = jnp.ones_like(l_pos)                                     # exp(l_pos - m)
        for k0 in range(0, k_total, k_strip):
            q = queue_ref[pl.ds(k0, k_strip), :]                     # (k_strip, C)
            lg = jnp.dot(q, a_bf,
                         preferred_element_type=jnp.float32)         # (k_strip, GG)
            m_new = jnp.maximum(m, jnp.max(lg, axis=0, keepdims=True))
            s = s * jnp.exp(m - m_new) + jnp.sum(jnp.exp(lg - m_new),
                                                 axis=0, keepdims=True)
            m = m_new

        ce = (m + jnp.log(s)) - l_pos                                # (1, GG)
        num = num + jnp.sum(ce * mask, keepdims=True)
        den = den + jnp.sum(mask, keepdims=True)

    # Masked mean == mean CE over the rows PyTorch keeps after the boolean
    # gather.  (If no cell passes, this is 0/0 = NaN, matching PyTorch.)
    out_ref[...] = num / den


# --------------------------------------------------------------------------
# Wrapper: full CDCLoss.forward.  Only free reshapes outside the kernel.
# `queue_t` is the queue buffer in (queue_len, feat_dim) layout (the natural
# layout for this kernel and for update_queue row-writes), any float dtype.
# --------------------------------------------------------------------------
@functools.partial(jax.jit,
                   static_argnames=("num_grid", "temperature", "conf_thresh"))
def cdc_loss_forward(emb_anc_nchw, emb_pos_nchw, conf_nchw, queue_t,
                     num_grid=NUM_GRID, temperature=TEMPERATURE,
                     conf_thresh=CONF_THRESH):
    B, C, H, W = emb_anc_nchw.shape
    K, Cq = queue_t.shape
    assert Cq == C
    HW, GG = H * W, num_grid * num_grid

    # glue: free, contiguous reshapes only (no transposes, no extra HBM copies)
    anc = emb_anc_nchw.reshape(B * C, HW).astype(jnp.float32)
    pos = emb_pos_nchw.reshape(B * C, HW).astype(jnp.float32)
    conf = conf_nchw.reshape(B, HW).astype(jnp.float32)
    pcell = jnp.asarray(_build_pool_cell_t(H, W, num_grid))          # (HW, GG)
    qt = queue_t if queue_t.dtype == jnp.bfloat16 else queue_t.astype(jnp.bfloat16)

    k_strip = 128 if K % 128 == 0 else K

    kernel = functools.partial(_cdc_loss_kernel, batch=B, channels=C,
                               temperature=float(temperature),
                               conf_thresh=float(conf_thresh),
                               k_strip=k_strip)

    flops = (2 * (B * 2 * C) * HW * GG        # fused pooling matmul
             + 2 * B * 8 * HW * GG            # f32 confidence pooling
             + 2 * B * K * C * GG)            # queue logits
    transcendentals = B * GG * (K + 8)        # exp / log / rsqrt
    bytes_accessed = ((anc.size + pos.size + conf.size + pcell.size) * 4
                      + qt.size * 2 + 4)

    # Single invocation, no grid: every operand lives whole in VMEM (~170 KB
    # total) on v5e/v6e/v7x.  TODO(synk): at production sizes (queue_len=65536,
    # bigger batch) add a K grid axis ("arbitrary") feeding the online-LSE
    # accumulators and a "parallel" axis for the two v7x TensorCores.
    out = pl.pallas_call(
        kernel,
        out_shape=jax.ShapeDtypeStruct((1, 1), jnp.float32),
        in_specs=[pl.BlockSpec(memory_space=pltpu.MemorySpace.VMEM)] * 5,
        out_specs=pl.BlockSpec(memory_space=pltpu.MemorySpace.VMEM),
        cost_estimate=pl.CostEstimate(flops=flops,
                                      transcendentals=transcendentals,
                                      bytes_accessed=bytes_accessed),
    )(anc, pos, conf, pcell, qt)
    return out[0, 0]


# --------------------------------------------------------------------------
# Pure-JAX reference (for correctness check only; divisible H,W case).
# --------------------------------------------------------------------------
def reference_loss(emb_anc, emb_pos, conf, queue, num_grid, temperature,
                   thresh):
    B, C, H, W = emb_anc.shape

    def pool(x):
        b, c = x.shape[0], x.shape[1]
        x = x.reshape(b, c, num_grid, H // num_grid, num_grid, W // num_grid)
        return x.mean(axis=(3, 5))                       # (B, C, G, G)

    a = pool(emb_anc * conf).transpose(0, 2, 3, 1).reshape(-1, C)
    p = pool(emb_pos * conf).transpose(0, 2, 3, 1).reshape(-1, C)
    ac = pool(conf).reshape(-1)
    an = jnp.linalg.norm(a, axis=1)
    pn = jnp.linalg.norm(p, axis=1)
    mask = (an != 0) & (pn != 0) & (ac >= thresh)
    a_hat = a / jnp.maximum(an, 1e-12)[:, None]
    p_hat = p / jnp.maximum(pn, 1e-12)[:, None]
    lpos = jnp.sum(a_hat * p_hat, axis=1, keepdims=True)
    lneg = a_hat @ queue
    logits = jnp.concatenate([lpos, lneg], axis=1) / temperature
    lse = jax.scipy.special.logsumexp(logits, axis=1)
    ce = lse - logits[:, 0]
    return jnp.sum(ce * mask) / jnp.sum(mask)


if __name__ == "__main__":
    B, H, W = 2, 14, 14    # H, W divisible by num_grid=7 (reference assumes it)

    key = jax.random.PRNGKey(0)
    k1, k2, k3, k4 = jax.random.split(key, 4)
    emb_anc = jax.random.normal(k1, (B, FEAT_DIM, H, W), dtype=jnp.float32)
    emb_pos = jax.random.normal(k2, (B, FEAT_DIM, H, W), dtype=jnp.float32)
    confidence = jax.random.uniform(k3, (B, 1, H, W), dtype=jnp.float32)

    # Deterministic queue buffer: randn(feat_dim, queue_len), L2-normalized per
    # column (as in __init__).  The kernel consumes it pre-transposed
    # (queue_len, feat_dim) in bf16 -- a one-time buffer layout/dtype choice;
    # update_queue would maintain exactly this layout (row writes).
    queue = jax.random.normal(k4, (FEAT_DIM, QUEUE_LEN), dtype=jnp.float32)
    queue = queue / jnp.linalg.norm(queue, axis=0, keepdims=True)
    queue_t = jnp.asarray(queue.T, dtype=jnp.bfloat16)
    # TODO(synk): update_queue / queue_ptr is stateful ring-buffer maintenance
    # (@torch.no_grad), not part of the forward pass; it is not implemented.

    loss = cdc_loss_forward(emb_anc, emb_pos, confidence, queue_t)
    loss = jax.block_until_ready(loss)

    ref = reference_loss(emb_anc, emb_pos, confidence, queue,
                         NUM_GRID, TEMPERATURE, CONF_THRESH)
    assert jnp.isfinite(loss), loss
    assert jnp.allclose(loss, ref, rtol=1e-2, atol=1e-2), (loss, ref)
    print("KERNEL_OK")
</pallas_src>

<mosaic_0001>
module attributes {stable_mosaic.version = 11 : i64} {
  func.func @_cdc_loss_kernel(%arg0: memref<64x196xf32, #tpu.memory_space<vmem>>, %arg1: memref<64x196xf32, #tpu.memory_space<vmem>>, %arg2: memref<2x196xf32, #tpu.memory_space<vmem>>, %arg3: memref<196x49xf32, #tpu.memory_space<vmem>>, %arg4: memref<512x32xbf16, #tpu.memory_space<vmem>>, %arg5: memref<1x1xf32, #tpu.memory_space<vmem>>) attributes {dimension_semantics = [], scalar_prefetch = 0 : i64, scratch_operands = 0 : i64, tpu.core_type = #tpu.core_type<tc>} {
    %c0 = arith.constant 0 : index
    %c0_0 = arith.constant 0 : index
    %0 = vector.load %arg3[%c0, %c0_0] : memref<196x49xf32, #tpu.memory_space<vmem>>, vector<196x49xf32>
    %1 = arith.truncf %0 : vector<196x49xf32> to vector<196x49xbf16>
    %c0_1 = arith.constant 0 : index
    %c0_2 = arith.constant 0 : index
    %2 = vector.load %arg2[%c0_1, %c0_2] : memref<2x196xf32, #tpu.memory_space<vmem>>, vector<1x196xf32>
    %c0_3 = arith.constant 0 : index
    %c0_4 = arith.constant 0 : index
    %3 = vector.load %arg0[%c0_3, %c0_4] : memref<64x196xf32, #tpu.memory_space<vmem>>, vector<32x196xf32>
    %4 = vector.broadcast %2 : vector<1x196xf32> to vector<32x196xf32>
    %5 = arith.mulf %3, %4 : vector<32x196xf32>
    %c0_5 = arith.constant 0 : index
    %c0_6 = arith.constant 0 : index
    %6 = vector.load %arg1[%c0_5, %c0_6] : memref<64x196xf32, #tpu.memory_space<vmem>>, vector<32x196xf32>
    %7 = vector.broadcast %2 : vector<1x196xf32> to vector<32x196xf32>
    %8 = arith.mulf %6, %7 : vector<32x196xf32>
    %c1 = arith.constant 1 : index
    %c0_7 = arith.constant 0 : index
    %9 = vector.load %arg2[%c1, %c0_7] : memref<2x196xf32, #tpu.memory_space<vmem>>, vector<1x196xf32>
    %c32 = arith.constant 32 : index
    %c0_8 = arith.constant 0 : index
    %10 = vector.load %arg0[%c32, %c0_8] : memref<64x196xf32, #tpu.memory_space<vmem>>, vector<32x196xf32>
    %11 = vector.broadcast %9 : vector<1x196xf32> to vector<32x196xf32>
    %12 = arith.mulf %10, %11 : vector<32x196xf32>
    %c32_9 = arith.constant 32 : index
    %c0_10 = arith.constant 0 : index
    %13 = vector.load %arg1[%c32_9, %c0_10] : memref<64x196xf32, #tpu.memory_space<vmem>>, vector<32x196xf32>
    %14 = vector.broadcast %9 : vector<1x196xf32> to vector<32x196xf32>
    %15 = arith.mulf %13, %14 : vector<32x196xf32>
    %16 = tpu.concatenate %5, %8, %12, %15 in 0 : vector<32x196xf32>, vector<32x196xf32>, vector<32x196xf32>, vector<32x196xf32> -> vector<128x196xf32>
    %17 = arith.truncf %16 : vector<128x196xf32> to vector<128x196xbf16>
    %cst = arith.constant dense<0.000000e+00> : vector<128x49xf32>
    %18 = tpu.matmul %17, %1, %cst {dimension_numbers = #tpu.dot_dimension_numbers<[1], [0], [0], [1], [0, 0, 1, 1], [], []>} : vector<128x196xbf16>, vector<196x49xbf16>, vector<128x49xf32> -> vector<128x49xf32>
    %cst_11 = arith.constant 0.000000e+00 : f32
    %19 = vector.broadcast %cst_11 : f32 to vector<1x1xf32>
    %cst_12 = arith.constant 0.000000e+00 : f32
    %20 = vector.broadcast %cst_12 : f32 to vector<1x1xf32>
    %21 = vector.extract_strided_slice %18 {offsets = [0, 0], sizes = [32, 49], strides = [1, 1]} : vector<128x49xf32> to vector<32x49xf32>
    %22 = vector.extract_strided_slice %18 {offsets = [32, 0], sizes = [32, 49], strides = [1, 1]} : vector<128x49xf32> to vector<32x49xf32>
    %23 = vector.shape_cast %2 : vector<1x196xf32> to vector<1x196xf32>
    %24 = vector.broadcast %23 : vector<1x196xf32> to vector<8x196xf32>
    %cst_13 = arith.constant dense<0.000000e+00> : vector<8x49xf32>
    %25 = tpu.matmul %24, %0, %cst_13 {dimension_numbers = #tpu.dot_dimension_numbers<[1], [0], [0], [1], [0, 0, 1, 1], [], []>} : vector<8x196xf32>, vector<196x49xf32>, vector<8x49xf32> -> vector<8x49xf32>
    %26 = vector.extract_strided_slice %25 {offsets = [0, 0], sizes = [1, 49], strides = [1, 1]} : vector<8x49xf32> to vector<1x49xf32>
    %27 = arith.mulf %21, %21 : vector<32x49xf32>
    %cst_14 = arith.constant dense<0.000000e+00> : vector<49xf32>
    %28 = vector.multi_reduction <add>, %27, %cst_14 [0] : vector<32x49xf32> to vector<49xf32>
    %29 = vector.shape_cast %28 : vector<49xf32> to vector<1x49xf32>
    %30 = arith.mulf %22, %22 : vector<32x49xf32>
    %cst_15 = arith.constant dense<0.000000e+00> : vector<49xf32>
    %31 = vector.multi_reduction <add>, %30, %cst_15 [0] : vector<32x49xf32> to vector<49xf32>
    %32 = vector.shape_cast %31 : vector<49xf32> to vector<1x49xf32>
    %cst_16 = arith.constant 0.000000e+00 : f32
    %33 = vector.broadcast %cst_16 : f32 to vector<1x49xf32>
    %34 = arith.cmpf ogt, %29, %33 : vector<1x49xf32>
    %cst_17 = arith.constant 0.000000e+00 : f32
    %35 = vector.broadcast %cst_17 : f32 to vector<1x49xf32>
    %36 = arith.cmpf ogt, %32, %35 : vector<1x49xf32>
    %37 = arith.andi %34, %36 : vector<1x49xi1>
    %cst_18 = arith.constant 2.000000e-01 : f32
    %38 = vector.broadcast %cst_18 : f32 to vector<1x49xf32>
    %39 = arith.cmpf oge, %26, %38 : vector<1x49xf32>
    %40 = arith.andi %37, %39 : vector<1x49xi1>
    %41 = arith.extui %40 : vector<1x49xi1> to vector<1x49xi32>
    %42 = arith.sitofp %41 : vector<1x49xi32> to vector<1x49xf32>
    %cst_19 = arith.constant 0.000000e+00 : f32
    %43 = vector.broadcast %cst_19 : f32 to vector<1x49xf32>
    %44 = arith.cmpf ogt, %29, %43 : vector<1x49xf32>
    %cst_20 = arith.constant 1.000000e+00 : f32
    %45 = vector.broadcast %cst_20 : f32 to vector<1x49xf32>
    %46 = arith.select %44, %29, %45 : vector<1x49xi1>, vector<1x49xf32>
    %47 = math.rsqrt %46 : vector<1x49xf32>
    %cst_21 = arith.constant 0.000000e+00 : f32
    %48 = vector.broadcast %cst_21 : f32 to vector<1x49xf32>
    %49 = arith.cmpf ogt, %32, %48 : vector<1x49xf32>
    %cst_22 = arith.constant 1.000000e+00 : f32
    %50 = vector.broadcast %cst_22 : f32 to vector<1x49xf32>
    %51 = arith.select %49, %32, %50 : vector<1x49xi1>, vector<1x49xf32>
    %52 = math.rsqrt %51 : vector<1x49xf32>
    %cst_23 = arith.constant 3.33333325 : f32
    %53 = vector.broadcast %cst_23 : f32 to vector<1x49xf32>
    %54 = arith.mulf %47, %53 : vector<1x49xf32>
    %55 = vector.broadcast %54 : vector<1x49xf32> to vector<32x49xf32>
    %56 = arith.mulf %21, %55 : vector<32x49xf32>
    %57 = vector.broadcast %52 : vector<1x49xf32> to vector<32x49xf32>
    %58 = arith.mulf %22, %57 : vector<32x49xf32>
    %59 = arith.mulf %56, %58 : vector<32x49xf32>
    %cst_24 = arith.constant dense<0.000000e+00> : vector<49xf32>
    %60 = vector.multi_reduction <add>, %59, %cst_24 [0] : vector<32x49xf32> to vector<49xf32>
    %61 = vector.shape_cast %60 : vector<49xf32> to vector<1x49xf32>
    %62 = arith.truncf %56 : vector<32x49xf32> to vector<32x49xbf16>
    %cst_25 = arith.constant 1.000000e+00 : f32
    %63 = vector.broadcast %cst_25 : f32 to vector<1x49xf32>
    %c0_26 = arith.constant 0 : index
    %c0_27 = arith.constant 0 : index
    %64 = vector.load %arg4[%c0_26, %c0_27] : memref<512x32xbf16, #tpu.memory_space<vmem>>, vector<128x32xbf16>
    %cst_28 = arith.constant dense<0.000000e+00> : vector<128x49xf32>
    %65 = tpu.matmul %64, %62, %cst_28 {dimension_numbers = #tpu.dot_dimension_numbers<[1], [0], [0], [1], [0, 0, 1, 1], [], []>} : vector<128x32xbf16>, vector<32x49xbf16>, vector<128x49xf32> -> vector<128x49xf32>
    %cst_29 = arith.constant dense<0xFF800000> : vector<49xf32>
    %66 = vector.multi_reduction <maximumf>, %65, %cst_29 [0] : vector<128x49xf32> to vector<49xf32>
    %67 = vector.shape_cast %66 : vector<49xf32> to vector<1x49xf32>
    %68 = arith.maximumf %61, %67 : vector<1x49xf32>
    %69 = arith.subf %61, %68 : vector<1x49xf32>
    %70 = math.exp %69 : vector<1x49xf32>
    %71 = arith.mulf %63, %70 : vector<1x49xf32>
    %72 = vector.broadcast %68 : vector<1x49xf32> to vector<128x49xf32>
    %73 = arith.subf %65, %72 : vector<128x49xf32>
    %74 = math.exp %73 : vector<128x49xf32>
    %cst_30 = arith.constant dense<0.000000e+00> : vector<49xf32>
    %75 = vector.multi_reduction <add>, %74, %cst_30 [0] : vector<128x49xf32> to vector<49xf32>
    %76 = vector.shape_cast %75 : vector<49xf32> to vector<1x49xf32>
    %77 = arith.addf %71, %76 : vector<1x49xf32>
    %c128 = arith.constant 128 : index
    %c0_31 = arith.constant 0 : index
    %78 = vector.load %arg4[%c128, %c0_31] : memref<512x32xbf16, #tpu.memory_space<vmem>>, vector<128x32xbf16>
    %cst_32 = arith.constant dense<0.000000e+00> : vector<128x49xf32>
    %79 = tpu.matmul %78, %62, %cst_32 {dimension_numbers = #tpu.dot_dimension_numbers<[1], [0], [0], [1], [0, 0, 1, 1], [], []>} : vector<128x32xbf16>, vector<32x49xbf16>, vector<128x49xf32> -> vector<128x49xf32>
    %cst_33 = arith.constant dense<0xFF800000> : vector<49xf32>
    %80 = vector.multi_reduction <maximumf>, %79, %cst_33 [0] : vector<128x49xf32> to vector<49xf32>
    %81 = vector.shape_cast %80 : vector<49xf32> to vector<1x49xf32>
    %82 = arith.maximumf %68, %81 : vector<1x49xf32>
    %83 = arith.subf %68, %82 : vector<1x49xf32>
    %84 = math.exp %83 : vector<1x49xf32>
    %85 = arith.mulf %77, %84 : vector<1x49xf32>
    %86 = vector.broadcast %82 : vector<1x49xf32> to vector<128x49xf32>
    %87 = arith.subf %79, %86 : vector<128x49xf32>
    %88 = math.exp %87 : vector<128x49xf32>
    %cst_34 = arith.constant dense<0.000000e+00> : vector<49xf32>
    %89 = vector.multi_reduction <add>, %88, %cst_34 [0] : vector<128x49xf32> to vector<49xf32>
    %90 = vector.shape_cast %89 : vector<49xf32> to vector<1x49xf32>
    %91 = arith.addf %85, %90 : vector<1x49xf32>
    %c256 = arith.constant 256 : index
    %c0_35 = arith.constant 0 : index
    %92 = vector.load %arg4[%c256, %c0_35] : memref<512x32xbf16, #tpu.memory_space<vmem>>, vector<128x32xbf16>
    %cst_36 = arith.constant dense<0.000000e+00> : vector<128x49xf32>
    %93 = tpu.matmul %92, %62, %cst_36 {dimension_numbers = #tpu.dot_dimension_numbers<[1], [0], [0], [1], [0, 0, 1, 1], [], []>} : vector<128x32xbf16>, vector<32x49xbf16>, vector<128x49xf32> -> vector<128x49xf32>
    %cst_37 = arith.constant dense<0xFF800000> : vector<49xf32>
    %94 = vector.multi_reduction <maximumf>, %93, %cst_37 [0] : vector<128x49xf32> to vector<49xf32>
    %95 = vector.shape_cast %94 : vector<49xf32> to vector<1x49xf32>
    %96 = arith.maximumf %82, %95 : vector<1x49xf32>
    %97 = arith.subf %82, %96 : vector<1x49xf32>
    %98 = math.exp %97 : vector<1x49xf32>
    %99 = arith.mulf %91, %98 : vector<1x49xf32>
    %100 = vector.broadcast %96 : vector<1x49xf32> to vector<128x49xf32>
    %101 = arith.subf %93, %100 : vector<128x49xf32>
    %102 = math.exp %101 : vector<128x49xf32>
    %cst_38 = arith.constant dense<0.000000e+00> : vector<49xf32>
    %103 = vector.multi_reduction <add>, %102, %cst_38 [0] : vector<128x49xf32> to vector<49xf32>
    %104 = vector.shape_cast %103 : vector<49xf32> to vector<1x49xf32>
    %105 = arith.addf %99, %104 : vector<1x49xf32>
    %c384 = arith.constant 384 : index
    %c0_39 = arith.constant 0 : index
    %106 = vector.load %arg4[%c384, %c0_39] : memref<512x32xbf16, #tpu.memory_space<vmem>>, vector<128x32xbf16>
    %cst_40 = arith.constant dense<0.000000e+00> : vector<128x49xf32>
    %107 = tpu.matmul %106, %62, %cst_40 {dimension_numbers = #tpu.dot_dimension_numbers<[1], [0], [0], [1], [0, 0, 1, 1], [], []>} : vector<128x32xbf16>, vector<32x49xbf16>, vector<128x49xf32> -> vector<128x49xf32>
    %cst_41 = arith.constant dense<0xFF800000> : vector<49xf32>
    %108 = vector.multi_reduction <maximumf>, %107, %cst_41 [0] : vector<128x49xf32> to vector<49xf32>
    %109 = vector.shape_cast %108 : vector<49xf32> to vector<1x49xf32>
    %110 = arith.maximumf %96, %109 : vector<1x49xf32>
    %111 = arith.subf %96, %110 : vector<1x49xf32>
    %112 = math.exp %111 : vector<1x49xf32>
    %113 = arith.mulf %105, %112 : vector<1x49xf32>
    %114 = vector.broadcast %110 : vector<1x49xf32> to vector<128x49xf32>
    %115 = arith.subf %107, %114 : vector<128x49xf32>
    %116 = math.exp %115 : vector<128x49xf32>
    %cst_42 = arith.constant dense<0.000000e+00> : vector<49xf32>
    %117 = vector.multi_reduction <add>, %116, %cst_42 [0] : vector<128x49xf32> to vector<49xf32>
    %118 = vector.shape_cast %117 : vector<49xf32> to vector<1x49xf32>
    %119 = arith.addf %113, %118 : vector<1x49xf32>
    %120 = math.log %119 : vector<1x49xf32>
    %121 = arith.addf %110, %120 : vector<1x49xf32>
    %122 = arith.subf %121, %61 : vector<1x49xf32>
    %123 = arith.mulf %122, %42 : vector<1x49xf32>
    %124 = vector.shape_cast %123 : vector<1x49xf32> to vector<1x1x49xf32>
    %cst_43 = arith.constant dense<0.000000e+00> : vector<1xf32>
    %125 = vector.multi_reduction <add>, %124, %cst_43 [1, 2] : vector<1x1x49xf32> to vector<1xf32>
    %126 = vector.shape_cast %125 : vector<1xf32> to vector<1x1x1xf32>
    %127 = vector.extract %126[0, 0, 0] : f32 from vector<1x1x1xf32>
    %128 = vector.broadcast %127 : f32 to vector<1x1xf32>
    %129 = arith.addf %19, %128 : vector<1x1xf32>
    %130 = vector.shape_cast %42 : vector<1x49xf32> to vector<1x1x49xf32>
    %cst_44 = arith.constant dense<0.000000e+00> : vector<1xf32>
    %131 = vector.multi_reduction <add>, %130, %cst_44 [1, 2] : vector<1x1x49xf32> to vector<1xf32>
    %132 = vector.shape_cast %131 : vector<1xf32> to vector<1x1x1xf32>
    %133 = vector.extract %132[0, 0, 0] : f32 from vector<1x1x1xf32>
    %134 = vector.broadcast %133 : f32 to vector<1x1xf32>
    %135 = arith.addf %20, %134 : vector<1x1xf32>
    %136 = vector.extract_strided_slice %18 {offsets = [64, 0], sizes = [32, 49], strides = [1, 1]} : vector<128x49xf32> to vector<32x49xf32>
    %137 = vector.extract_strided_slice %18 {offsets = [96, 0], sizes = [32, 49], strides = [1, 1]} : vector<128x49xf32> to vector<32x49xf32>
    %138 = vector.shape_cast %9 : vector<1x196xf32> to vector<1x196xf32>
    %139 = vector.broadcast %138 : vector<1x196xf32> to vector<8x196xf32>
    %cst_45 = arith.constant dense<0.000000e+00> : vector<8x49xf32>
    %140 = tpu.matmul %139, %0, %cst_45 {dimension_numbers = #tpu.dot_dimension_numbers<[1], [0], [0], [1], [0, 0, 1, 1], [], []>} : vector<8x196xf32>, vector<196x49xf32>, vector<8x49xf32> -> vector<8x49xf32>
    %141 = vector.extract_strided_slice %140 {offsets = [0, 0], sizes = [1, 49], strides = [1, 1]} : vector<8x49xf32> to vector<1x49xf32>
    %142 = arith.mulf %136, %136 : vector<32x49xf32>
    %cst_46 = arith.constant dense<0.000000e+00> : vector<49xf32>
    %143 = vector.multi_reduction <add>, %142, %cst_46 [0] : vector<32x49xf32> to vector<49xf32>
    %144 = vector.shape_cast %143 : vector<49xf32> to vector<1x49xf32>
    %145 = arith.mulf %137, %137 : vector<32x49xf32>
    %cst_47 = arith.constant dense<0.000000e+00> : vector<49xf32>
    %146 = vector.multi_reduction <add>, %145, %cst_47 [0] : vector<32x49xf32> to vector<49xf32>
    %147 = vector.shape_cast %146 : vector<49xf32> to vector<1x49xf32>
    %cst_48 = arith.constant 0.000000e+00 : f32
    %148 = vector.broadcast %cst_48 : f32 to vector<1x49xf32>
    %149 = arith.cmpf ogt, %144, %148 : vector<1x49xf32>
    %cst_49 = arith.constant 0.000000e+00 : f32
    %150 = vector.broadcast %cst_49 : f32 to vector<1x49xf32>
    %151 = arith.cmpf ogt, %147, %150 : vector<1x49xf32>
    %152 = arith.andi %149, %151 : vector<1x49xi1>
    %cst_50 = arith.constant 2.000000e-01 : f32
    %153 = vector.broadcast %cst_50 : f32 to vector<1x49xf32>
    %154 = arith.cmpf oge, %141, %153 : vector<1x49xf32>
    %155 = arith.andi %152, %154 : vector<1x49xi1>
    %156 = arith.extui %155 : vector<1x49xi1> to vector<1x49xi32>
    %157 = arith.sitofp %156 : vector<1x49xi32> to vector<1x49xf32>
    %cst_51 = arith.constant 0.000000e+00 : f32
    %158 = vector.broadcast %cst_51 : f32 to vector<1x49xf32>
    %159 = arith.cmpf ogt, %144, %158 : vector<1x49xf32>
    %cst_52 = arith.constant 1.000000e+00 : f32
    %160 = vector.broadcast %cst_52 : f32 to vector<1x49xf32>
    %161 = arith.select %159, %144, %160 : vector<1x49xi1>, vector<1x49xf32>
    %162 = math.rsqrt %161 : vector<1x49xf32>
    %cst_53 = arith.constant 0.000000e+00 : f32
    %163 = vector.broadcast %cst_53 : f32 to vector<1x49xf32>
    %164 = arith.cmpf ogt, %147, %163 : vector<1x49xf32>
    %cst_54 = arith.constant 1.000000e+00 : f32
    %165 = vector.broadcast %cst_54 : f32 to vector<1x49xf32>
    %166 = arith.select %164, %147, %165 : vector<1x49xi1>, vector<1x49xf32>
    %167 = math.rsqrt %166 : vector<1x49xf32>
    %cst_55 = arith.constant 3.33333325 : f32
    %168 = vector.broadcast %cst_55 : f32 to vector<1x49xf32>
    %169 = arith.mulf %162, %168 : vector<1x49xf32>
    %170 = vector.broadcast %169 : vector<1x49xf32> to vector<32x49xf32>
    %171 = arith.mulf %136, %170 : vector<32x49xf32>
    %172 = vector.broadcast %167 : vector<1x49xf32> to vector<32x49xf32>
    %173 = arith.mulf %137, %172 : vector<32x49xf32>
    %174 = arith.mulf %171, %173 : vector<32x49xf32>
    %cst_56 = arith.constant dense<0.000000e+00> : vector<49xf32>
    %175 = vector.multi_reduction <add>, %174, %cst_56 [0] : vector<32x49xf32> to vector<49xf32>
    %176 = vector.shape_cast %175 : vector<49xf32> to vector<1x49xf32>
    %177 = arith.truncf %171 : vector<32x49xf32> to vector<32x49xbf16>
    %cst_57 = arith.constant 1.000000e+00 : f32
    %178 = vector.broadcast %cst_57 : f32 to vector<1x49xf32>
    %c0_58 = arith.constant 0 : index
    %c0_59 = arith.constant 0 : index
    %179 = vector.load %arg4[%c0_58, %c0_59] : memref<512x32xbf16, #tpu.memory_space<vmem>>, vector<128x32xbf16>
    %cst_60 = arith.constant dense<0.000000e+00> : vector<128x49xf32>
    %180 = tpu.matmul %179, %177, %cst_60 {dimension_numbers = #tpu.dot_dimension_numbers<[1], [0], [0], [1], [0, 0, 1, 1], [], []>} : vector<128x32xbf16>, vector<32x49xbf16>, vector<128x49xf32> -> vector<128x49xf32>
    %cst_61 = arith.constant dense<0xFF800000> : vector<49xf32>
    %181 = vector.multi_reduction <maximumf>, %180, %cst_61 [0] : vector<128x49xf32> to vector<49xf32>
    %182 = vector.shape_cast %181 : vector<49xf32> to vector<1x49xf32>
    %183 = arith.maximumf %176, %182 : vector<1x49xf32>
    %184 = arith.subf %176, %183 : vector<1x49xf32>
    %185 = math.exp %184 : vector<1x49xf32>
    %186 = arith.mulf %178, %185 : vector<1x49xf32>
    %187 = vector.broadcast %183 : vector<1x49xf32> to vector<128x49xf32>
    %188 = arith.subf %180, %187 : vector<128x49xf32>
    %189 = math.exp %188 : vector<128x49xf32>
    %cst_62 = arith.constant dense<0.000000e+00> : vector<49xf32>
    %190 = vector.multi_reduction <add>, %189, %cst_62 [0] : vector<128x49xf32> to vector<49xf32>
    %191 = vector.shape_cast %190 : vector<49xf32> to vector<1x49xf32>
    %192 = arith.addf %186, %191 : vector<1x49xf32>
    %c128_63 = arith.constant 128 : index
    %c0_64 = arith.constant 0 : index
    %193 = vector.load %arg4[%c128_63, %c0_64] : memref<512x32xbf16, #tpu.memory_space<vmem>>, vector<128x32xbf16>
    %cst_65 = arith.constant dense<0.000000e+00> : vector<128x49xf32>
    %194 = tpu.matmul %193, %177, %cst_65 {dimension_numbers = #tpu.dot_dimension_numbers<[1], [0], [0], [1], [0, 0, 1, 1], [], []>} : vector<128x32xbf16>, vector<32x49xbf16>, vector<128x49xf32> -> vector<128x49xf32>
    %cst_66 = arith.constant dense<0xFF800000> : vector<49xf32>
    %195 = vector.multi_reduction <maximumf>, %194, %cst_66 [0] : vector<128x49xf32> to vector<49xf32>
    %196 = vector.shape_cast %195 : vector<49xf32> to vector<1x49xf32>
    %197 = arith.maximumf %183, %196 : vector<1x49xf32>
    %198 = arith.subf %183, %197 : vector<1x49xf32>
    %199 = math.exp %198 : vector<1x49xf32>
    %200 = arith.mulf %192, %199 : vector<1x49xf32>
    %201 = vector.broadcast %197 : vector<1x49xf32> to vector<128x49xf32>
    %202 = arith.subf %194, %201 : vector<128x49xf32>
    %203 = math.exp %202 : vector<128x49xf32>
    %cst_67 = arith.constant dense<0.000000e+00> : vector<49xf32>
    %204 = vector.multi_reduction <add>, %203, %cst_67 [0] : vector<128x49xf32> to vector<49xf32>
    %205 = vector.shape_cast %204 : vector<49xf32> to vector<1x49xf32>
    %206 = arith.addf %200, %205 : vector<1x49xf32>
    %c256_68 = arith.constant 256 : index
    %c0_69 = arith.constant 0 : index
    %207 = vector.load %arg4[%c256_68, %c0_69] : memref<512x32xbf16, #tpu.memory_space<vmem>>, vector<128x32xbf16>
    %cst_70 = arith.constant dense<0.000000e+00> : vector<128x49xf32>
    %208 = tpu.matmul %207, %177, %cst_70 {dimension_numbers = #tpu.dot_dimension_numbers<[1], [0], [0], [1], [0, 0, 1, 1], [], []>} : vector<128x32xbf16>, vector<32x49xbf16>, vector<128x49xf32> -> vector<128x49xf32>
    %cst_71 = arith.constant dense<0xFF800000> : vector<49xf32>
    %209 = vector.multi_reduction <maximumf>, %208, %cst_71 [0] : vector<128x49xf32> to vector<49xf32>
    %210 = vector.shape_cast %209 : vector<49xf32> to vector<1x49xf32>
    %211 = arith.maximumf %197, %210 : vector<1x49xf32>
    %212 = arith.subf %197, %211 : vector<1x49xf32>
    %213 = math.exp %212 : vector<1x49xf32>
    %214 = arith.mulf %206, %213 : vector<1x49xf32>
    %215 = vector.broadcast %211 : vector<1x49xf32> to vector<128x49xf32>
    %216 = arith.subf %208, %215 : vector<128x49xf32>
    %217 = math.exp %216 : vector<128x49xf32>
    %cst_72 = arith.constant dense<0.000000e+00> : vector<49xf32>
    %218 = vector.multi_reduction <add>, %217, %cst_72 [0] : vector<128x49xf32> to vector<49xf32>
    %219 = vector.shape_cast %218 : vector<49xf32> to vector<1x49xf32>
    %220 = arith.addf %214, %219 : vector<1x49xf32>
    %c384_73 = arith.constant 384 : index
    %c0_74 = arith.constant 0 : index
    %221 = vector.load %arg4[%c384_73, %c0_74] : memref<512x32xbf16, #tpu.memory_space<vmem>>, vector<128x32xbf16>
    %cst_75 = arith.constant dense<0.000000e+00> : vector<128x49xf32>
    %222 = tpu.matmul %221, %177, %cst_75 {dimension_numbers = #tpu.dot_dimension_numbers<[1], [0], [0], [1], [0, 0, 1, 1], [], []>} : vector<128x32xbf16>, vector<32x49xbf16>, vector<128x49xf32> -> vector<128x49xf32>
    %cst_76 = arith.constant dense<0xFF800000> : vector<49xf32>
    %223 = vector.multi_reduction <maximumf>, %222, %cst_76 [0] : vector<128x49xf32> to vector<49xf32>
    %224 = vector.shape_cast %223 : vector<49xf32> to vector<1x49xf32>
    %225 = arith.maximumf %211, %224 : vector<1x49xf32>
    %226 = arith.subf %211, %225 : vector<1x49xf32>
    %227 = math.exp %226 : vector<1x49xf32>
    %228 = arith.mulf %220, %227 : vector<1x49xf32>
    %229 = vector.broadcast %225 : vector<1x49xf32> to vector<128x49xf32>
    %230 = arith.subf %222, %229 : vector<128x49xf32>
    %231 = math.exp %230 : vector<128x49xf32>
    %cst_77 = arith.constant dense<0.000000e+00> : vector<49xf32>
    %232 = vector.multi_reduction <add>, %231, %cst_77 [0] : vector<128x49xf32> to vector<49xf32>
    %233 = vector.shape_cast %232 : vector<49xf32> to vector<1x49xf32>
    %234 = arith.addf %228, %233 : vector<1x49xf32>
    %235 = math.log %234 : vector<1x49xf32>
    %236 = arith.addf %225, %235 : vector<1x49xf32>
    %237 = arith.subf %236, %176 : vector<1x49xf32>
    %238 = arith.mulf %237, %157 : vector<1x49xf32>
    %239 = vector.shape_cast %238 : vector<1x49xf32> to vector<1x1x49xf32>
    %cst_78 = arith.constant dense<0.000000e+00> : vector<1xf32>
    %240 = vector.multi_reduction <add>, %239, %cst_78 [1, 2] : vector<1x1x49xf32> to vector<1xf32>
    %241 = vector.shape_cast %240 : vector<1xf32> to vector<1x1x1xf32>
    %242 = vector.extract %241[0, 0, 0] : f32 from vector<1x1x1xf32>
    %243 = vector.broadcast %242 : f32 to vector<1x1xf32>
    %244 = arith.addf %129, %243 : vector<1x1xf32>
    %245 = vector.shape_cast %157 : vector<1x49xf32> to vector<1x1x49xf32>
    %cst_79 = arith.constant dense<0.000000e+00> : vector<1xf32>
    %246 = vector.multi_reduction <add>, %245, %cst_79 [1, 2] : vector<1x1x49xf32> to vector<1xf32>
    %247 = vector.shape_cast %246 : vector<1xf32> to vector<1x1x1xf32>
    %248 = vector.extract %247[0, 0, 0] : f32 from vector<1x1x1xf32>
    %249 = vector.broadcast %248 : f32 to vector<1x1xf32>
    %250 = arith.addf %135, %249 : vector<1x1xf32>
    %251 = arith.divf %244, %250 : vector<1x1xf32>
    %c0_80 = arith.constant 0 : index
    %c0_81 = arith.constant 0 : index
    %252 = vector.load %arg5[%c0_80, %c0_81] : memref<1x1xf32, #tpu.memory_space<vmem>>, vector<1x1xf32>
    tpu.vector_store %arg5[%c0_80, %c0_81], %251 {strides = array<i32>} : memref<1x1xf32, #tpu.memory_space<vmem>>, vector<1x1xf32>,
    return
  }
}

</mosaic_0001>

<llo_original>
// kernel: cdc_loss_forward.1
$region0: #{cdc_loss_forward.1}
  #allocation0 [shape = 'u32[]', space=smem, size = 0x4, offset = 0x4, fixed_abs, tag = 'smem constant byte address 0x4 - core index']
  #allocation1 [shape = 'u32[144,128]{1,0:T(1,128)}', space=vmem, size = 0x12000, scoped, tag = 'internal scratch']
  %s0 = inlined_call_operand.vmem [shape: f32[64,196], index: 0, kind: input, shape index: {}]
  %s1 = inlined_call_operand.vmem [shape: f32[64,196], index: 1, kind: input, shape index: {}]
  %s2 = inlined_call_operand.vmem [shape: f32[2,196], index: 2, kind: input, shape index: {}]
  %s3 = inlined_call_operand.vmem [shape: f32[196,49], index: 3, kind: input, shape index: {}]
  %s4 = inlined_call_operand.vmem [shape: bf16[512,32], index: 4, kind: input, shape index: {}]
  %s5 = inlined_call_operand.hbm [shape: f32[1,1], index: 5, kind: output, shape index: {}]
  %s6 = sld [smem:[#allocation0]]
  $region30: #{cdc_loss_forward.1} parent=0
    _
  %s8 = ssub.s32 1, %s6
  %s9 = scalar_select 0, %s8, %s6
  $region1: #{cdc_loss_forward.1} parent=0
    #allocation2 [shape = 'u8[512]{0}', space=vmem, size = 0x400, scoped, tag = 'output window, operand 0, single buffered']
    #allocation3 [shape = 's32[1]{0}', space=sflag, size = 0x4, scoped, tag = 'scoped memory for cdc_loss_forward.1']
    %10 = vsyncpa [#allocation3], 0
    // Predicated region
    $region2: #{cdc_loss_forward.1} parent=1 // pred_check
      _
    $region3: #{cdc_loss_forward.1} parent=1 // pred_check_branch
      %12 = sbr.rel (0) target = $region5
    $region4: #{cdc_loss_forward.1} parent=1 // pred_region
      _
    $region5: #{cdc_loss_forward.1} parent=1 // pred_fallthru
      _
    // Predicated region
    $region6: #{cdc_loss_forward.1} parent=1 // pred_check
      _
    $region7: #{cdc_loss_forward.1} parent=1 // pred_check_branch
      %14 = sbr.rel (0) target = $region9
    $region8: #{cdc_loss_forward.1} parent=1 // pred_region
      _
    $region9: #{cdc_loss_forward.1} parent=1 // pred_fallthru
      _
    // Predicated region
    $region10: #{cdc_loss_forward.1} parent=1 // pred_check
      _
    $region11: #{cdc_loss_forward.1} parent=1 // pred_check_branch
      %16 = sbr.rel (0) target = $region13
    $region12: #{cdc_loss_forward.1} parent=1 // pred_region
      _
    $region13: #{cdc_loss_forward.1} parent=1 // pred_fallthru
      _
    // Predicated region
    $region14: #{cdc_loss_forward.1} parent=1 // pred_check
      _
    $region15: #{cdc_loss_forward.1} parent=1 // pred_check_branch
      %18 = sbr.rel (0) target = $region17
    $region16: #{cdc_loss_forward.1} parent=1 // pred_region
      _
    $region17: #{cdc_loss_forward.1} parent=1 // pred_fallthru
      _
    // Predicated region
    $region18: #{cdc_loss_forward.1} parent=1 // pred_check
      _
    $region19: #{cdc_loss_forward.1} parent=1 // pred_check_branch
      %20 = sbr.rel (0) target = $region21
    $region20: #{cdc_loss_forward.1} parent=1 // pred_region
      _
    $region21: #{cdc_loss_forward.1} parent=1 // pred_fallthru
      _
    %v22 = vld [vmem:[%s3] sm:$0xff]
    %v23 = vld [vmem:[%s3 + $0x8] sm:$0xff]
    %v24 = vld [vmem:[%s3 + $0x10] sm:$0xff]
    %v25 = vld [vmem:[%s3 + $0x18] sm:$0xff]
    %v26 = vld [vmem:[%s3 + $0x20] sm:$0xff]
    %v27 = vld [vmem:[%s3 + $0x28] sm:$0xff]
    %v28 = vld [vmem:[%s3 + $0x30] sm:$0xff]
    %v29 = vld [vmem:[%s3 + $0x38] sm:$0xff]
    %v30 = vld [vmem:[%s3 + $0x40] sm:$0xff]
    %v31 = vld [vmem:[%s3 + $0x48] sm:$0xff]
    %v32 = vld [vmem:[%s3 + $0x50] sm:$0xff]
    %v33 = vld [vmem:[%s3 + $0x58] sm:$0xff]
    %v34 = vld [vmem:[%s3 + $0x60] sm:$0xff]
    %v35 = vld [vmem:[%s3 + $0x68] sm:$0xff]
    %v36 = vld [vmem:[%s3 + $0x70] sm:$0xff]
    %v37 = vld [vmem:[%s3 + $0x78] sm:$0xff]
    %v38 = vld [vmem:[%s3 + $0x80] sm:$0xff]
    %v39 = vld [vmem:[%s3 + $0x88] sm:$0xff]
    %v40 = vld [vmem:[%s3 + $0x90] sm:$0xff]
    %v41 = vld [vmem:[%s3 + $0x98] sm:$0xff]
    %v42 = vld [vmem:[%s3 + $0xa0] sm:$0xff]
    %v43 = vld [vmem:[%s3 + $0xa8] sm:$0xff]
    %v44 = vld [vmem:[%s3 + $0xb0] sm:$0xff]
    %v45 = vld [vmem:[%s3 + $0xb8] sm:$0xff]
    %v46 = vld [vmem:[%s3 + $0xc0] sm:$0xf]
    %v47 = vpack.c.bf16 %v23, %v22
    %v48 = vpack.c.bf16 %v25, %v24
    %v49 = vpack.c.bf16 %v27, %v26
    %v50 = vpack.c.bf16 %v29, %v28
    %v51 = vpack.c.bf16 %v31, %v30
    %v52 = vpack.c.bf16 %v33, %v32
    %v53 = vpack.c.bf16 %v35, %v34
    %v54 = vpack.c.bf16 %v37, %v36
    %v55 = vpack.c.bf16 %v39, %v38
    %v56 = vpack.c.bf16 %v41, %v40
    %v57 = vpack.c.bf16 %v43, %v42
    %v58 = vpack.c.bf16 %v45, %v44
    %v59 = vpack.c.bf16 %v46, %v46
    %v60 = vld [vmem:[%s2] ss:$2 sm:$0x3]
    %v61 = vld [vmem:[%s0] sm:$0xff]
    %v62 = vld [vmem:[%s0 + $0x8] sm:$0xff]
    %v63 = vld [vmem:[%s0 + $0x10] sm:$0xff]
    %v64 = vld [vmem:[%s0 + $0x18] sm:$0xff]
    %v65 = vld [vmem:[%s0 + $0x20] sm:$0xff]
    %v66 = vld [vmem:[%s0 + $0x28] sm:$0xff]
    %v67 = vld [vmem:[%s0 + $0x30] sm:$0xff]
    %v68 = vld [vmem:[%s0 + $0x38] sm:$0xff]
    %v70 = vlaneseq
    %v71 = vshrl.u32 %v70, 7
    %v72 = vsub.s32 0, %v71
    %v73 = vrot.slane %v60, %v72
    %v74 = vlaneseq
    %v75 = vshrl.u32 %v74, 7
    %v76 = vsub.s32 1, %v75
    %v77 = vrot.slane %v60, %v76
    %v80 = vmul.f32 %v61, %v73
    %v81 = vmul.f32 %v62, %v77
    %v82 = vmul.f32 %v63, %v73
    %v83 = vmul.f32 %v64, %v77
    %v84 = vmul.f32 %v65, %v73
    %v85 = vmul.f32 %v66, %v77
    %v86 = vmul.f32 %v67, %v73
    %v87 = vmul.f32 %v68, %v77
    %v88 = vld [vmem:[%s1] sm:$0xff]
    %v89 = vld [vmem:[%s1 + $0x8] sm:$0xff]
    %v90 = vld [vmem:[%s1 + $0x10] sm:$0xff]
    %v91 = vld [vmem:[%s1 + $0x18] sm:$0xff]
    %v92 = vld [vmem:[%s1 + $0x20] sm:$0xff]
    %v93 = vld [vmem:[%s1 + $0x28] sm:$0xff]
    %v94 = vld [vmem:[%s1 + $0x30] sm:$0xff]
    %v95 = vld [vmem:[%s1 + $0x38] sm:$0xff]
    %v96 = vmul.f32 %v88, %v73
    %v97 = vmul.f32 %v89, %v77
    %v98 = vmul.f32 %v90, %v73
    %v99 = vmul.f32 %v91, %v77
    %v100 = vmul.f32 %v92, %v73
    %v101 = vmul.f32 %v93, %v77
    %v102 = vmul.f32 %v94, %v73
    %v103 = vmul.f32 %v95, %v77
    %s104 = scalar_lea.vmem %s2, 1
    %v105 = vld [vmem:[%s104] ss:$2 sm:$0x3]
    %v106 = vld [vmem:[%s0 + $0x40] sm:$0xff]
    %v107 = vld [vmem:[%s0 + $0x48] sm:$0xff]
    %v108 = vld [vmem:[%s0 + $0x50] sm:$0xff]
    %v109 = vld [vmem:[%s0 + $0x58] sm:$0xff]
    %v110 = vld [vmem:[%s0 + $0x60] sm:$0xff]
    %v111 = vld [vmem:[%s0 + $0x68] sm:$0xff]
    %v112 = vld [vmem:[%s0 + $0x70] sm:$0xff]
    %v113 = vld [vmem:[%s0 + $0x78] sm:$0xff]
    %v115 = vlaneseq
    %v116 = vshrl.u32 %v115, 7
    %v117 = vsub.s32 0, %v116
    %v118 = vrot.slane %v105, %v117
    %v119 = vlaneseq
    %v120 = vshrl.u32 %v119, 7
    %v121 = vsub.s32 1, %v120
    %v122 = vrot.slane %v105, %v121
    %v125 = vmul.f32 %v106, %v118
    %v126 = vmul.f32 %v107, %v122
    %v127 = vmul.f32 %v108, %v118
    %v128 = vmul.f32 %v109, %v122
    %v129 = vmul.f32 %v110, %v118
    %v130 = vmul.f32 %v111, %v122
    %v131 = vmul.f32 %v112, %v118
    %v132 = vmul.f32 %v113, %v122
    %v133 = vld [vmem:[%s1 + $0x40] sm:$0xff]
    %v134 = vld [vmem:[%s1 + $0x48] sm:$0xff]
    %v135 = vld [vmem:[%s1 + $0x50] sm:$0xff]
    %v136 = vld [vmem:[%s1 + $0x58] sm:$0xff]
    %v137 = vld [vmem:[%s1 + $0x60] sm:$0xff]
    %v138 = vld [vmem:[%s1 + $0x68] sm:$0xff]
    %v139 = vld [vmem:[%s1 + $0x70] sm:$0xff]
    %v140 = vld [vmem:[%s1 + $0x78] sm:$0xff]
    %v141 = vmul.f32 %v133, %v118
    %v142 = vmul.f32 %v134, %v122
    %v143 = vmul.f32 %v135, %v118
    %v144 = vmul.f32 %v136, %v122
    %v145 = vmul.f32 %v137, %v118
    %v146 = vmul.f32 %v138, %v122
    %v147 = vmul.f32 %v139, %v118
    %v148 = vmul.f32 %v140, %v122
    %v149 = vpack.c.bf16 %v82, %v80
    %v150 = vpack.c.bf16 %v83, %v81
    %v151 = vpack.c.bf16 %v86, %v84
    %v152 = vpack.c.bf16 %v87, %v85
    %v153 = vpack.c.bf16 %v98, %v96
    %v154 = vpack.c.bf16 %v99, %v97
    %v155 = vpack.c.bf16 %v102, %v100
    %v156 = vpack.c.bf16 %v103, %v101
    %v157 = vpack.c.bf16 %v127, %v125
    %v158 = vpack.c.bf16 %v128, %v126
    %v159 = vpack.c.bf16 %v131, %v129
    %v160 = vpack.c.bf16 %v132, %v130
    %v161 = vpack.c.bf16 %v143, %v141
    %v162 = vpack.c.bf16 %v144, %v142
    %v163 = vpack.c.bf16 %v147, %v145
    %v164 = vpack.c.bf16 %v148, %v146
    %vm165 = vcmask 556032
    %v167 = vsel %vm165, %v150, 0
    %v170 = vsel %vm165, %v152, 0
    %v173 = vsel %vm165, %v154, 0
    %v176 = vsel %vm165, %v156, 0
    %v179 = vsel %vm165, %v158, 0
    %v182 = vsel %vm165, %v160, 0
    %v185 = vsel %vm165, %v162, 0
    %v188 = vsel %vm165, %v164, 0
    %vm190 = vcmask 1041408
    %v192 = vsel %vm190, %v59, 0
    %194 = vmatprep.subr.bf16.mxu0 0
    %195 = vmatpush1.bf16.msra.mxu0 %v54
    %196 = vmatprep.subr.bf16.mxu0 0
    %197 = vmatpush1.bf16.msra.mxu0 %v53
    %198 = vmatprep.subr.bf16.mxu0 0
    %199 = vmatpush1.bf16.msra.mxu0 %v52
    %200 = vmatprep.subr.bf16.mxu0 0
    %201 = vmatpush1.bf16.msra.mxu0 %v51
    %202 = vmatprep.subr.bf16.mxu0 0
    %203 = vmatpush1.bf16.msra.mxu0 %v50
    %204 = vmatprep.subr.bf16.mxu0 0
    %205 = vmatpush1.bf16.msra.mxu0 %v49
    %206 = vmatprep.subr.bf16.mxu0 0
    %207 = vmatpush1.bf16.msra.mxu0 %v48
    %208 = vmatprep.subr.bf16.mxu0 0
    %209 = vmatpush1.bf16.msra.mxu0 %v47
    %210 = vmatprep.subr.bf16.mxu0 0
    %211 = vmatpush2.bf16.msra.mxu0 0
    %212 = vmatprep.subr.bf16.mxu0 0
    %213 = vmatpush2.bf16.msra.mxu0 0
    %214 = vmatprep.subr.bf16.mxu0 0
    %215 = vmatpush2.bf16.msra.mxu0 0
    %216 = vmatprep.subr.bf16.mxu0 0
    %217 = vmatpush2.bf16.msra.mxu0 %v192
    %218 = vmatprep.subr.bf16.mxu0 0
    %219 = vmatpush2.bf16.msra.mxu0 %v58
    %220 = vmatprep.subr.bf16.mxu0 0
    %221 = vmatpush2.bf16.msra.mxu0 %v57
    %222 = vmatprep.subr.bf16.mxu0 0
    %223 = vmatpush2.bf16.msra.mxu0 %v56
    %224 = vmatprep.subr.bf16.mxu0 0
    %225 = vmatpush2.bf16.msra.mxu0 %v55
    %226 = vmatprep.mubr.bf16.mxu0 %v167
    %227 = vmatmul.mubr.bf16.gmra.mxu0 %v149
    %v228 = vpop.f32.mrf.mxu0
    %v229 = vadd.f32 0.0, %v228
    %v230 = vpop.f32.mrf.mxu0
    %v231 = vpop.f32.mrf.mxu0
    %v232 = vadd.f32 0.0, %v231
    %v233 = vpop.f32.mrf.mxu0
    %234 = vmatprep.mubr.bf16.mxu0 %v170
    %235 = vmatmul.mubr.bf16.gmra.mxu0 %v151
    %v236 = vpop.f32.mrf.mxu0
    %v237 = vadd.f32 0.0, %v236
    %v238 = vpop.f32.mrf.mxu0
    %v239 = vpop.f32.mrf.mxu0
    %v240 = vadd.f32 0.0, %v239
    %v241 = vpop.f32.mrf.mxu0
    %242 = vmatprep.mubr.bf16.mxu0 %v173
    %243 = vmatmul.mubr.bf16.gmra.mxu0 %v153
    %v244 = vpop.f32.mrf.mxu0
    %v245 = vadd.f32 0.0, %v244
    %v246 = vpop.f32.mrf.mxu0
    %v247 = vpop.f32.mrf.mxu0
    %v248 = vadd.f32 0.0, %v247
    %v249 = vpop.f32.mrf.mxu0
    %250 = vmatprep.mubr.bf16.mxu0 %v176
    %251 = vmatmul.mubr.bf16.gmra.mxu0 %v155
    %v252 = vpop.f32.mrf.mxu0
    %v253 = vadd.f32 0.0, %v252
    %v254 = vpop.f32.mrf.mxu0
    %v255 = vpop.f32.mrf.mxu0
    %v256 = vadd.f32 0.0, %v255
    %v257 = vpop.f32.mrf.mxu0
    %258 = vmatprep.mubr.bf16.mxu0 %v179
    %259 = vmatmul.mubr.bf16.gmra.mxu0 %v157
    %v260 = vpop.f32.mrf.mxu0
    %v261 = vadd.f32 0.0, %v260
    %v262 = vpop.f32.mrf.mxu0
    %v263 = vpop.f32.mrf.mxu0
    %v264 = vadd.f32 0.0, %v263
    %v265 = vpop.f32.mrf.mxu0
    %266 = vmatprep.mubr.bf16.mxu0 %v182
    %267 = vmatmul.mubr.bf16.gmra.mxu0 %v159
    %v268 = vpop.f32.mrf.mxu0
    %v269 = vadd.f32 0.0, %v268
    %v270 = vpop.f32.mrf.mxu0
    %v271 = vpop.f32.mrf.mxu0
    %v272 = vadd.f32 0.0, %v271
    %v273 = vpop.f32.mrf.mxu0
    %274 = vmatprep.mubr.bf16.mxu0 %v185
    %275 = vmatmul.mubr.bf16.gmra.mxu0 %v161
    %v276 = vpop.f32.mrf.mxu0
    %v277 = vadd.f32 0.0, %v276
    %v278 = vpop.f32.mrf.mxu0
    %v279 = vpop.f32.mrf.mxu0
    %v280 = vadd.f32 0.0, %v279
    %v281 = vpop.f32.mrf.mxu0
    %282 = vmatprep.mubr.bf16.mxu0 %v188
    %283 = vmatmul.mubr.bf16.gmra.mxu0 %v163
    %v284 = vpop.f32.mrf.mxu0
    %v285 = vadd.f32 0.0, %v284
    %v286 = vpop.f32.mrf.mxu0
    %v287 = vpop.f32.mrf.mxu0
    %v288 = vadd.f32 0.0, %v287
    %v289 = vpop.f32.mrf.mxu0
    %290 = vdwg.mxu0
    %v291 = vsel %vm165, %v77, 0
    %vm293 = vcmask 1043456
    %v295 = vsel %vm293, %v46, 0
    %297 = vmatprep.subr.mxu0 0.0
    %298 = vmatpush1.msra.mxu0 %v37
    %299 = vmatprep.subr.mxu0 0.0
    %300 = vmatpush1.msra.mxu0 %v36
    %301 = vmatprep.subr.mxu0 0.0
    %302 = vmatpush1.msra.mxu0 %v35
    %303 = vmatprep.subr.mxu0 0.0
    %304 = vmatpush1.msra.mxu0 %v34
    %305 = vmatprep.subr.mxu0 0.0
    %306 = vmatpush1.msra.mxu0 %v33
    %307 = vmatprep.subr.mxu0 0.0
    %308 = vmatpush1.msra.mxu0 %v32
    %309 = vmatprep.subr.mxu0 0.0
    %310 = vmatpush1.msra.mxu0 %v31
    %311 = vmatprep.subr.mxu0 0.0
    %312 = vmatpush1.msra.mxu0 %v30
    %313 = vmatprep.subr.mxu0 0.0
    %314 = vmatpush1.msra.mxu0 %v29
    %315 = vmatprep.subr.mxu0 0.0
    %316 = vmatpush1.msra.mxu0 %v28
    %317 = vmatprep.subr.mxu0 0.0
    %318 = vmatpush1.msra.mxu0 %v27
    %319 = vmatprep.subr.mxu0 0.0
    %320 = vmatpush1.msra.mxu0 %v26
    %321 = vmatprep.subr.mxu0 0.0
    %322 = vmatpush1.msra.mxu0 %v25
    %323 = vmatprep.subr.mxu0 0.0
    %324 = vmatpush1.msra.mxu0 %v24
    %325 = vmatprep.subr.mxu0 0.0
    %326 = vmatpush1.msra.mxu0 %v23
    %327 = vmatprep.subr.mxu0 0.0
    %328 = vmatpush1.msra.mxu0 %v22
    %329 = vmatprep.subr.mxu0 0.0
    %330 = vmatpush2.msra.mxu0 0.0
    %331 = vmatprep.subr.mxu0 0.0
    %332 = vmatpush2.msra.mxu0 0.0
    %333 = vmatprep.subr.mxu0 0.0
    %334 = vmatpush2.msra.mxu0 0.0
    %335 = vmatprep.subr.mxu0 0.0
    %336 = vmatpush2.msra.mxu0 0.0
    %337 = vmatprep.subr.mxu0 0.0
    %338 = vmatpush2.msra.mxu0 0.0
    %339 = vmatprep.subr.mxu0 0.0
    %340 = vmatpush2.msra.mxu0 0.0
    %341 = vmatprep.subr.mxu0 0.0
    %342 = vmatpush2.msra.mxu0 0.0
    %343 = vmatprep.subr.mxu0 0.0
    %344 = vmatpush2.msra.mxu0 %v295
    %345 = vmatprep.subr.mxu0 0.0
    %346 = vmatpush2.msra.mxu0 %v45
    %347 = vmatprep.subr.mxu0 0.0
    %348 = vmatpush2.msra.mxu0 %v44
    %349 = vmatprep.subr.mxu0 0.0
    %350 = vmatpush2.msra.mxu0 %v43
    %351 = vmatprep.subr.mxu0 0.0
    %352 = vmatpush2.msra.mxu0 %v42
    %353 = vmatprep.subr.mxu0 0.0
    %354 = vmatpush2.msra.mxu0 %v41
    %355 = vmatprep.subr.mxu0 0.0
    %356 = vmatpush2.msra.mxu0 %v40
    %357 = vmatprep.subr.mxu0 0.0
    %358 = vmatpush2.msra.mxu0 %v39
    %359 = vmatprep.subr.mxu0 0.0
    %360 = vmatpush2.msra.mxu0 %v38
    %361 = vmatprep.mubr.f32.mxu0 %v291
    %362 = vmatmul.mubr.f32.gmra.mxu0 %v73
    %v363 = vpop.f32.mrf.mxu0
    %v364 = vadd.f32 0.0, %v363
    %v365 = vpop.f32.mrf.mxu0
    %366 = vdwg.mxu0
    %v367 = vmul.f32 %v229, %v229
    %v368 = vmul.f32 %v232, %v232
    %v369 = vmul.f32 %v237, %v237
    %v370 = vmul.f32 %v240, %v240
    %vm371 = vcmask 400384
    %v372 = vsel %vm371, %v367, 0.0
    %v373 = vsel %vm371, %v368, 0.0
    %v374 = vadd.f32 %v372, %v373
    %v375 = vsel %vm371, %v369, 0.0
    %v376 = vadd.f32 %v374, %v375
    %v377 = vsel %vm371, %v370, 0.0
    %v378 = vadd.f32 %v376, %v377
    %v379 = vrot.slane %v378, 4
    %v380 = vadd.f32 %v378, %v379
    %v381 = vrot.slane %v380, 2
    %v382 = vadd.f32 %v380, %v381
    %v383 = vrot.slane %v382, 1
    %v384 = vadd.f32 %v382, %v383
    %v385 = vmul.f32 %v245, %v245
    %v386 = vmul.f32 %v248, %v248
    %v387 = vmul.f32 %v253, %v253
    %v388 = vmul.f32 %v256, %v256
    %v389 = vsel %vm371, %v385, 0.0
    %v390 = vsel %vm371, %v386, 0.0
    %v391 = vadd.f32 %v389, %v390
    %v392 = vsel %vm371, %v387, 0.0
    %v393 = vadd.f32 %v391, %v392
    %v394 = vsel %vm371, %v388, 0.0
    %v395 = vadd.f32 %v393, %v394
    %v396 = vrot.slane %v395, 4
    %v397 = vadd.f32 %v395, %v396
    %v398 = vrot.slane %v397, 2
    %v399 = vadd.f32 %v397, %v398
    %v400 = vrot.slane %v399, 1
    %v401 = vadd.f32 %v399, %v400
    %vm402 = vcmp.gt.f32.partialorder %v384, 0.0
    %vm403 = vcmp.gt.f32.partialorder %v401, 0.0
    %vm404 = vmand %vm402, %vm403
    %vm405 = vcmp.ge.f32.partialorder %v364, 0.2
    %vm406 = vmand %vm404, %vm405
    %v407 = vsel %vm406, 1, 0
    %v408 = vcvt.s32.f32 %v407
    %v409 = vsel %vm402, %v384, 1.0
    %v410 = vrsqrt.pop %v409
    %v411 = vsel %vm403, %v401, 1.0
    %v412 = vrsqrt.pop %v411
    %v413 = vmul.f32 %v410, 3.3333333
    %v414 = vmul.f32 %v229, %v413
    %v415 = vmul.f32 %v232, %v413
    %v416 = vmul.f32 %v237, %v413
    %v417 = vmul.f32 %v240, %v413
    %v418 = vmul.f32 %v245, %v412
    %v419 = vmul.f32 %v248, %v412
    %v420 = vmul.f32 %v253, %v412
    %v421 = vmul.f32 %v256, %v412
    %v422 = vmul.f32 %v414, %v418
    %v423 = vmul.f32 %v415, %v419
    %v424 = vmul.f32 %v416, %v420
    %v425 = vmul.f32 %v417, %v421
    %v426 = vsel %vm371, %v422, 0.0
    %v427 = vsel %vm371, %v423, 0.0
    %v428 = vadd.f32 %v426, %v427
    %v429 = vsel %vm371, %v424, 0.0
    %v430 = vadd.f32 %v428, %v429
    %v431 = vsel %vm371, %v425, 0.0
    %v432 = vadd.f32 %v430, %v431
    %v433 = vrot.slane %v432, 4
    %v434 = vadd.f32 %v432, %v433
    %v435 = vrot.slane %v434, 2
    %v436 = vadd.f32 %v434, %v435
    %v437 = vrot.slane %v436, 1
    %v438 = vadd.f32 %v436, %v437
    %v439 = vpack.c.bf16 %v415, %v414
    %v440 = vpack.c.bf16 %v417, %v416
    %v441 = vld [vmem:[%s4] sm:$0xf]
    %v442 = vld [vmem:[%s4 + $0x4] sm:$0xf]
    %v443 = vld [vmem:[%s4 + $0x8] sm:$0xf]
    %v444 = vld [vmem:[%s4 + $0xc] sm:$0xf]
    %v445 = vld [vmem:[%s4 + $0x10] sm:$0xf]
    %v446 = vld [vmem:[%s4 + $0x14] sm:$0xf]
    %v447 = vld [vmem:[%s4 + $0x18] sm:$0xf]
    %v448 = vld [vmem:[%s4 + $0x1c] sm:$0xf]
    %v449 = vld [vmem:[%s4 + $0x20] sm:$0xf]
    %v450 = vld [vmem:[%s4 + $0x24] sm:$0xf]
    %v451 = vld [vmem:[%s4 + $0x28] sm:$0xf]
    %v452 = vld [vmem:[%s4 + $0x2c] sm:$0xf]
    %v453 = vld [vmem:[%s4 + $0x30] sm:$0xf]
    %v454 = vld [vmem:[%s4 + $0x34] sm:$0xf]
    %v455 = vld [vmem:[%s4 + $0x38] sm:$0xf]
    %v456 = vld [vmem:[%s4 + $0x3c] sm:$0xf]
    %v473 = vunpack.c.l.b16 %v441
    %v474 = vunpack.c.l.b16 %v442
    %v475 = vunpack.c.l.b16 %v443
    %v476 = vunpack.c.l.b16 %v444
    %v477 = vunpack.c.l.b16 %v445
    %v478 = vunpack.c.l.b16 %v446
    %v479 = vunpack.c.l.b16 %v447
    %v480 = vunpack.c.l.b16 %v448
    %v481 = vunpack.c.l.b16 %v449
    %v482 = vunpack.c.l.b16 %v450
    %v483 = vunpack.c.l.b16 %v451
    %v484 = vunpack.c.l.b16 %v452
    %v485 = vunpack.c.l.b16 %v453
    %v486 = vunpack.c.l.b16 %v454
    %v487 = vunpack.c.l.b16 %v455
    %v488 = vunpack.c.l.b16 %v456
    %v489 = vpack.c.b16 %v474, %v473
    %v490 = vpack.c.b16 %v476, %v475
    %v491 = vpack.c.b16 %v478, %v477
    %v492 = vpack.c.b16 %v480, %v479
    %v493 = vpack.c.b16 %v482, %v481
    %v494 = vpack.c.b16 %v484, %v483
    %v495 = vpack.c.b16 %v486, %v485
    %v496 = vpack.c.b16 %v488, %v487
    %vm497 = vcmask 261120
    %v499 = vsel %vm497, %v489, 0
    %v502 = vsel %vm497, %v490, 0
    %v505 = vsel %vm497, %v491, 0
    %v508 = vsel %vm497, %v492, 0
    %v511 = vsel %vm497, %v493, 0
    %v514 = vsel %vm497, %v494, 0
    %v517 = vsel %vm497, %v495, 0
    %v520 = vsel %vm497, %v496, 0
    %522 = vmatprep.subr.bf16.mxu0 0
    %523 = vmatpush1.bf16.msra.mxu0 0
    %524 = vmatprep.subr.bf16.mxu0 0
    %525 = vmatpush1.bf16.msra.mxu0 0
    %526 = vmatprep.subr.bf16.mxu0 0
    %527 = vmatpush1.bf16.msra.mxu0 0
    %528 = vmatprep.subr.bf16.mxu0 0
    %529 = vmatpush1.bf16.msra.mxu0 0
    %530 = vmatprep.subr.bf16.mxu0 0
    %531 = vmatpush1.bf16.msra.mxu0 0
    %532 = vmatprep.subr.bf16.mxu0 0
    %533 = vmatpush1.bf16.msra.mxu0 0
    %534 = vmatprep.subr.bf16.mxu0 0
    %535 = vmatpush1.bf16.msra.mxu0 %v440
    %536 = vmatprep.subr.bf16.mxu0 0
    %537 = vmatpush1.bf16.msra.mxu0 %v439
    %538 = vmatprep.subr.bf16.mxu0 0
    %539 = vmatpush2.bf16.msra.mxu0 0
    %540 = vmatprep.subr.bf16.mxu0 0
    %541 = vmatpush2.bf16.msra.mxu0 0
    %542 = vmatprep.subr.bf16.mxu0 0
    %543 = vmatpush2.bf16.msra.mxu0 0
    %544 = vmatprep.subr.bf16.mxu0 0
    %545 = vmatpush2.bf16.msra.mxu0 0
    %546 = vmatprep.subr.bf16.mxu0 0
    %547 = vmatpush2.bf16.msra.mxu0 0
    %548 = vmatprep.subr.bf16.mxu0 0
    %549 = vmatpush2.bf16.msra.mxu0 0
    %550 = vmatprep.subr.bf16.mxu0 0
    %551 = vmatpush2.bf16.msra.mxu0 0
    %552 = vmatprep.subr.bf16.mxu0 0
    %553 = vmatpush2.bf16.msra.mxu0 0
    %554 = vmatprep.mubr.bf16.mxu0 0
    %555 = vmatmul.mubr.bf16.gmra.mxu0 %v499
    %v556 = vpop.f32.mrf.mxu0
    %v557 = vadd.f32 0.0, %v556
    %v558 = vpop.f32.mrf.mxu0
    %v559 = vpop.f32.mrf.mxu0
    %v560 = vadd.f32 0.0, %v559
    %v561 = vpop.f32.mrf.mxu0
    %562 = vmatprep.mubr.bf16.mxu0 0
    %563 = vmatmul.mubr.bf16.gmra.mxu0 %v502
    %v564 = vpop.f32.mrf.mxu0
    %v565 = vadd.f32 0.0, %v564
    %v566 = vpop.f32.mrf.mxu0
    %v567 = vpop.f32.mrf.mxu0
    %v568 = vadd.f32 0.0, %v567
    %v569 = vpop.f32.mrf.mxu0
    %570 = vmatprep.mubr.bf16.mxu0 0
    %571 = vmatmul.mubr.bf16.gmra.mxu0 %v505
    %v572 = vpop.f32.mrf.mxu0
    %v573 = vadd.f32 0.0, %v572
    %v574 = vpop.f32.mrf.mxu0
    %v575 = vpop.f32.mrf.mxu0
    %v576 = vadd.f32 0.0, %v575
    %v577 = vpop.f32.mrf.mxu0
    %578 = vmatprep.mubr.bf16.mxu0 0
    %579 = vmatmul.mubr.bf16.gmra.mxu0 %v508
    %v580 = vpop.f32.mrf.mxu0
    %v581 = vadd.f32 0.0, %v580
    %v582 = vpop.f32.mrf.mxu0
    %v583 = vpop.f32.mrf.mxu0
    %v584 = vadd.f32 0.0, %v583
    %v585 = vpop.f32.mrf.mxu0
    %586 = vmatprep.mubr.bf16.mxu0 0
    %587 = vmatmul.mubr.bf16.gmra.mxu0 %v511
    %v588 = vpop.f32.mrf.mxu0
    %v589 = vadd.f32 0.0, %v588
    %v590 = vpop.f32.mrf.mxu0
    %v591 = vpop.f32.mrf.mxu0
    %v592 = vadd.f32 0.0, %v591
    %v593 = vpop.f32.mrf.mxu0
    %594 = vmatprep.mubr.bf16.mxu0 0
    %595 = vmatmul.mubr.bf16.gmra.mxu0 %v514
    %v596 = vpop.f32.mrf.mxu0
    %v597 = vadd.f32 0.0, %v596
    %v598 = vpop.f32.mrf.mxu0
    %v599 = vpop.f32.mrf.mxu0
    %v600 = vadd.f32 0.0, %v599
    %v601 = vpop.f32.mrf.mxu0
    %602 = vmatprep.mubr.bf16.mxu0 0
    %603 = vmatmul.mubr.bf16.gmra.mxu0 %v517
    %v604 = vpop.f32.mrf.mxu0
    %v605 = vadd.f32 0.0, %v604
    %v606 = vpop.f32.mrf.mxu0
    %v607 = vpop.f32.mrf.mxu0
    %v608 = vadd.f32 0.0, %v607
    %v609 = vpop.f32.mrf.mxu0
    %610 = vmatprep.mubr.bf16.mxu0 0
    %611 = vmatmul.mubr.bf16.gmra.mxu0 %v520
    %v612 = vpop.f32.mrf.mxu0
    %v613 = vadd.f32 0.0, %v612
    %v614 = vpop.f32.mrf.mxu0
    %v615 = vpop.f32.mrf.mxu0
    %v616 = vadd.f32 0.0, %v615
    %v617 = vpop.f32.mrf.mxu0
    %618 = vdwg.mxu0
    %v619 = vsel %vm371, %v557, -inf
    %v620 = vsel %vm371, %v560, -inf
    %v621 = vsel %vm371, %v565, -inf
    %v622 = vsel %vm371, %v568, -inf
    %v623 = vsel %vm371, %v573, -inf
    %v624 = vmax.f32 %v619, %v623
    %v625 = vsel %vm371, %v576, -inf
    %v626 = vmax.f32 %v620, %v625
    %v627 = vsel %vm371, %v581, -inf
    %v628 = vmax.f32 %v621, %v627
    %v629 = vsel %vm371, %v584, -inf
    %v630 = vmax.f32 %v622, %v629
    %v631 = vsel %vm371, %v589, -inf
    %v632 = vmax.f32 %v624, %v631
    %v633 = vsel %vm371, %v592, -inf
    %v634 = vmax.f32 %v626, %v633
    %v635 = vsel %vm371, %v597, -inf
    %v636 = vmax.f32 %v628, %v635
    %v637 = vsel %vm371, %v600, -inf
    %v638 = vmax.f32 %v630, %v637
    %v639 = vsel %vm371, %v605, -inf
    %v640 = vmax.f32 %v632, %v639
    %v641 = vsel %vm371, %v608, -inf
    %v642 = vmax.f32 %v634, %v641
    %v643 = vsel %vm371, %v613, -inf
    %v644 = vmax.f32 %v636, %v643
    %v645 = vsel %vm371, %v616, -inf
    %v646 = vmax.f32 %v638, %v645
    %v647 = vmax.f32 %v640, %v642
    %v648 = vmax.f32 %v644, %v646
    %v649 = vmax.f32 %v647, %v648
    %v650 = vrot.slane %v649, 4
    %v651 = vmax.f32 %v649, %v650
    %v652 = vrot.slane %v651, 2
    %v653 = vmax.f32 %v651, %v652
    %v654 = vrot.slane %v653, 1
    %v655 = vmax.f32 %v653, %v654
    %v656 = vmax.f32 %v438, %v655
    %v657 = vsub.f32 %v438, %v656
    %v658 = vmul.f32 %v657, 1.442695
    %v659 = vpow.pop %v658
    %v660 = vsub.f32 %v557, %v656
    %v661 = vsub.f32 %v560, %v656
    %v662 = vsub.f32 %v565, %v656
    %v663 = vsub.f32 %v568, %v656
    %v664 = vsub.f32 %v573, %v656
    %v665 = vsub.f32 %v576, %v656
    %v666 = vsub.f32 %v581, %v656
    %v667 = vsub.f32 %v584, %v656
    %v668 = vsub.f32 %v589, %v656
    %v669 = vsub.f32 %v592, %v656
    %v670 = vsub.f32 %v597, %v656
    %v671 = vsub.f32 %v600, %v656
    %v672 = vsub.f32 %v605, %v656
    %v673 = vsub.f32 %v608, %v656
    %v674 = vsub.f32 %v613, %v656
    %v675 = vsub.f32 %v616, %v656
    %v676 = vmul.f32 %v660, 1.442695
    %v677 = vpow.pop %v676
    %v678 = vmul.f32 %v661, 1.442695
    %v679 = vpow.pop %v678
    %v680 = vmul.f32 %v662, 1.442695
    %v681 = vpow.pop %v680
    %v682 = vmul.f32 %v663, 1.442695
    %v683 = vpow.pop %v682
    %v684 = vmul.f32 %v664, 1.442695
    %v685 = vpow.pop %v684
    %v686 = vmul.f32 %v665, 1.442695
    %v687 = vpow.pop %v686
    %v688 = vmul.f32 %v666, 1.442695
    %v689 = vpow.pop %v688
    %v690 = vmul.f32 %v667, 1.442695
    %v691 = vpow.pop %v690
    %v692 = vmul.f32 %v668, 1.442695
    %v693 = vpow.pop %v692
    %v694 = vmul.f32 %v669, 1.442695
    %v695 = vpow.pop %v694
    %v696 = vmul.f32 %v670, 1.442695
    %v697 = vpow.pop %v696
    %v698 = vmul.f32 %v671, 1.442695
    %v699 = vpow.pop %v698
    %v700 = vmul.f32 %v672, 1.442695
    %v701 = vpow.pop %v700
    %v702 = vmul.f32 %v673, 1.442695
    %v703 = vpow.pop %v702
    %v704 = vmul.f32 %v674, 1.442695
    %v705 = vpow.pop %v704
    %v706 = vmul.f32 %v675, 1.442695
    %v707 = vpow.pop %v706
    %v708 = vsel %vm371, %v677, 0.0
    %v709 = vsel %vm371, %v679, 0.0
    %v710 = vadd.f32 %v708, %v709
    %v711 = vsel %vm371, %v681, 0.0
    %v712 = vadd.f32 %v710, %v711
    %v713 = vsel %vm371, %v683, 0.0
    %v714 = vadd.f32 %v712, %v713
    %v715 = vsel %vm371, %v685, 0.0
    %v716 = vadd.f32 %v714, %v715
    %v717 = vsel %vm371, %v687, 0.0
    %v718 = vadd.f32 %v716, %v717
    %v719 = vsel %vm371, %v689, 0.0
    %v720 = vadd.f32 %v718, %v719
    %v721 = vsel %vm371, %v691, 0.0
    %v722 = vadd.f32 %v720, %v721
    %v723 = vsel %vm371, %v693, 0.0
    %v724 = vadd.f32 %v722, %v723
    %v725 = vsel %vm371, %v695, 0.0
    %v726 = vadd.f32 %v724, %v725
    %v727 = vsel %vm371, %v697, 0.0
    %v728 = vadd.f32 %v726, %v727
    %v729 = vsel %vm371, %v699, 0.0
    %v730 = vadd.f32 %v728, %v729
    %v731 = vsel %vm371, %v701, 0.0
    %v732 = vadd.f32 %v730, %v731
    %v733 = vsel %vm371, %v703, 0.0
    %v734 = vadd.f32 %v732, %v733
    %v735 = vsel %vm371, %v705, 0.0
    %v736 = vadd.f32 %v734, %v735
    %v737 = vsel %vm371, %v707, 0.0
    %v738 = vadd.f32 %v736, %v737
    %v739 = vrot.slane %v738, 4
    %v740 = vadd.f32 %v738, %v739
    %v741 = vrot.slane %v740, 2
    %v742 = vadd.f32 %v740, %v741
    %v743 = vrot.slane %v742, 1
    %v744 = vadd.f32 %v742, %v743
    %v745 = vadd.f32 %v659, %v744
    %v746 = vld [vmem:[%s4 + $0x40] sm:$0xf]
    %v747 = vld [vmem:[%s4 + $0x44] sm:$0xf]
    %v748 = vld [vmem:[%s4 + $0x48] sm:$0xf]
    %v749 = vld [vmem:[%s4 + $0x4c] sm:$0xf]
    %v750 = vld [vmem:[%s4 + $0x50] sm:$0xf]
    %v751 = vld [vmem:[%s4 + $0x54] sm:$0xf]
    %v752 = vld [vmem:[%s4 + $0x58] sm:$0xf]
    %v753 = vld [vmem:[%s4 + $0x5c] sm:$0xf]
    %v754 = vld [vmem:[%s4 + $0x60] sm:$0xf]
    %v755 = vld [vmem:[%s4 + $0x64] sm:$0xf]
    %v756 = vld [vmem:[%s4 + $0x68] sm:$0xf]
    %v757 = vld [vmem:[%s4 + $0x6c] sm:$0xf]
    %v758 = vld [vmem:[%s4 + $0x70] sm:$0xf]
    %v759 = vld [vmem:[%s4 + $0x74] sm:$0xf]
    %v760 = vld [vmem:[%s4 + $0x78] sm:$0xf]
    %v761 = vld [vmem:[%s4 + $0x7c] sm:$0xf]
    %v778 = vunpack.c.l.b16 %v746
    %v779 = vunpack.c.l.b16 %v747
    %v780 = vunpack.c.l.b16 %v748
    %v781 = vunpack.c.l.b16 %v749
    %v782 = vunpack.c.l.b16 %v750
    %v783 = vunpack.c.l.b16 %v751
    %v784 = vunpack.c.l.b16 %v752
    %v785 = vunpack.c.l.b16 %v753
    %v786 = vunpack.c.l.b16 %v754
    %v787 = vunpack.c.l.b16 %v755
    %v788 = vunpack.c.l.b16 %v756
    %v789 = vunpack.c.l.b16 %v757
    %v790 = vunpack.c.l.b16 %v758
    %v791 = vunpack.c.l.b16 %v759
    %v792 = vunpack.c.l.b16 %v760
    %v793 = vunpack.c.l.b16 %v761
    %v794 = vpack.c.b16 %v779, %v778
    %v795 = vpack.c.b16 %v781, %v780
    %v796 = vpack.c.b16 %v783, %v782
    %v797 = vpack.c.b16 %v785, %v784
    %v798 = vpack.c.b16 %v787, %v786
    %v799 = vpack.c.b16 %v789, %v788
    %v800 = vpack.c.b16 %v791, %v790
    %v801 = vpack.c.b16 %v793, %v792
    %v803 = vsel %vm497, %v794, 0
    %v806 = vsel %vm497, %v795, 0
    %v809 = vsel %vm497, %v796, 0
    %v812 = vsel %vm497, %v797, 0
    %v815 = vsel %vm497, %v798, 0
    %v818 = vsel %vm497, %v799, 0
    %v821 = vsel %vm497, %v800, 0
    %v824 = vsel %vm497, %v801, 0
    %826 = vmatprep.subr.bf16.mxu0 0
    %827 = vmatpush1.bf16.msra.mxu0 0
    %828 = vmatprep.subr.bf16.mxu0 0
    %829 = vmatpush1.bf16.msra.mxu0 0
    %830 = vmatprep.subr.bf16.mxu0 0
    %831 = vmatpush1.bf16.msra.mxu0 0
    %832 = vmatprep.subr.bf16.mxu0 0
    %833 = vmatpush1.bf16.msra.mxu0 0
    %834 = vmatprep.subr.bf16.mxu0 0
    %835 = vmatpush1.bf16.msra.mxu0 0
    %836 = vmatprep.subr.bf16.mxu0 0
    %837 = vmatpush1.bf16.msra.mxu0 0
    %838 = vmatprep.subr.bf16.mxu0 0
    %839 = vmatpush1.bf16.msra.mxu0 %v440
    %840 = vmatprep.subr.bf16.mxu0 0
    %841 = vmatpush1.bf16.msra.mxu0 %v439
    %842 = vmatprep.subr.bf16.mxu0 0
    %843 = vmatpush2.bf16.msra.mxu0 0
    %844 = vmatprep.subr.bf16.mxu0 0
    %845 = vmatpush2.bf16.msra.mxu0 0
    %846 = vmatprep.subr.bf16.mxu0 0
    %847 = vmatpush2.bf16.msra.mxu0 0
    %848 = vmatprep.subr.bf16.mxu0 0
    %849 = vmatpush2.bf16.msra.mxu0 0
    %850 = vmatprep.subr.bf16.mxu0 0
    %851 = vmatpush2.bf16.msra.mxu0 0
    %852 = vmatprep.subr.bf16.mxu0 0
    %853 = vmatpush2.bf16.msra.mxu0 0
    %854 = vmatprep.subr.bf16.mxu0 0
    %855 = vmatpush2.bf16.msra.mxu0 0
    %856 = vmatprep.subr.bf16.mxu0 0
    %857 = vmatpush2.bf16.msra.mxu0 0
    %858 = vmatprep.mubr.bf16.mxu0 0
    %859 = vmatmul.mubr.bf16.gmra.mxu0 %v803
    %v860 = vpop.f32.mrf.mxu0
    %v861 = vadd.f32 0.0, %v860
    %v862 = vpop.f32.mrf.mxu0
    %v863 = vpop.f32.mrf.mxu0
    %v864 = vadd.f32 0.0, %v863
    %v865 = vpop.f32.mrf.mxu0
    %866 = vmatprep.mubr.bf16.mxu0 0
    %867 = vmatmul.mubr.bf16.gmra.mxu0 %v806
    %v868 = vpop.f32.mrf.mxu0
    %v869 = vadd.f32 0.0, %v868
    %v870 = vpop.f32.mrf.mxu0
    %v871 = vpop.f32.mrf.mxu0
    %v872 = vadd.f32 0.0, %v871
    %v873 = vpop.f32.mrf.mxu0
    %874 = vmatprep.mubr.bf16.mxu0 0
    %875 = vmatmul.mubr.bf16.gmra.mxu0 %v809
    %v876 = vpop.f32.mrf.mxu0
    %v877 = vadd.f32 0.0, %v876
    %v878 = vpop.f32.mrf.mxu0
    %v879 = vpop.f32.mrf.mxu0
    %v880 = vadd.f32 0.0, %v879
    %v881 = vpop.f32.mrf.mxu0
    %882 = vmatprep.mubr.bf16.mxu0 0
    %883 = vmatmul.mubr.bf16.gmra.mxu0 %v812
    %v884 = vpop.f32.mrf.mxu0
    %v885 = vadd.f32 0.0, %v884
    %v886 = vpop.f32.mrf.mxu0
    %v887 = vpop.f32.mrf.mxu0
    %v888 = vadd.f32 0.0, %v887
    %v889 = vpop.f32.mrf.mxu0
    %890 = vmatprep.mubr.bf16.mxu0 0
    %891 = vmatmul.mubr.bf16.gmra.mxu0 %v815
    %v892 = vpop.f32.mrf.mxu0
    %v893 = vadd.f32 0.0, %v892
    %v894 = vpop.f32.mrf.mxu0
    %v895 = vpop.f32.mrf.mxu0
    %v896 = vadd.f32 0.0, %v895
    %v897 = vpop.f32.mrf.mxu0
    %898 = vmatprep.mubr.bf16.mxu0 0
    %899 = vmatmul.mubr.bf16.gmra.mxu0 %v818
    %v900 = vpop.f32.mrf.mxu0
    %v901 = vadd.f32 0.0, %v900
    %v902 = vpop.f32.mrf.mxu0
    %v903 = vpop.f32.mrf.mxu0
    %v904 = vadd.f32 0.0, %v903
    %v905 = vpop.f32.mrf.mxu0
    %906 = vmatprep.mubr.bf16.mxu0 0
    %907 = vmatmul.mubr.bf16.gmra.mxu0 %v821
    %v908 = vpop.f32.mrf.mxu0
    %v909 = vadd.f32 0.0, %v908
    %v910 = vpop.f32.mrf.mxu0
    %v911 = vpop.f32.mrf.mxu0
    %v912 = vadd.f32 0.0, %v911
    %v913 = vpop.f32.mrf.mxu0
    %914 = vmatprep.mubr.bf16.mxu0 0
    %915 = vmatmul.mubr.bf16.gmra.mxu0 %v824
    %v916 = vpop.f32.mrf.mxu0
    %v917 = vadd.f32 0.0, %v916
    %v918 = vpop.f32.mrf.mxu0
    %v919 = vpop.f32.mrf.mxu0
    %v920 = vadd.f32 0.0, %v919
    %v921 = vpop.f32.mrf.mxu0
    %922 = vdwg.mxu0
    %v923 = vsel %vm371, %v861, -inf
    %v924 = vsel %vm371, %v864, -inf
    %v925 = vsel %vm371, %v869, -inf
    %v926 = vsel %vm371, %v872, -inf
    %v927 = vsel %vm371, %v877, -inf
    %v928 = vmax.f32 %v923, %v927
    %v929 = vsel %vm371, %v880, -inf
    %v930 = vmax.f32 %v924, %v929
    %v931 = vsel %vm371, %v885, -inf
    %v932 = vmax.f32 %v925, %v931
    %v933 = vsel %vm371, %v888, -inf
    %v934 = vmax.f32 %v926, %v933
    %v935 = vsel %vm371, %v893, -inf
    %v936 = vmax.f32 %v928, %v935
    %v937 = vsel %vm371, %v896, -inf
    %v938 = vmax.f32 %v930, %v937
    %v939 = vsel %vm371, %v901, -inf
    %v940 = vmax.f32 %v932, %v939
    %v941 = vsel %vm371, %v904, -inf
    %v942 = vmax.f32 %v934, %v941
    %v943 = vsel %vm371, %v909, -inf
    %v944 = vmax.f32 %v936, %v943
    %v945 = vsel %vm371, %v912, -inf
    %v946 = vmax.f32 %v938, %v945
    %v947 = vsel %vm371, %v917, -inf
    %v948 = vmax.f32 %v940, %v947
    %v949 = vsel %vm371, %v920, -inf
    %v950 = vmax.f32 %v942, %v949
    %v951 = vmax.f32 %v944, %v946
    %v952 = vmax.f32 %v948, %v950
    %v953 = vmax.f32 %v951, %v952
    %v954 = vrot.slane %v953, 4
    %v955 = vmax.f32 %v953, %v954
    %v956 = vrot.slane %v955, 2
    %v957 = vmax.f32 %v955, %v956
    %v958 = vrot.slane %v957, 1
    %v959 = vmax.f32 %v957, %v958
    %v960 = vmax.f32 %v656, %v959
    %v961 = vsub.f32 %v656, %v960
    %v962 = vmul.f32 %v961, 1.442695
    %v963 = vpow.pop %v962
    %v964 = vmul.f32 %v745, %v963
    %v965 = vsub.f32 %v861, %v960
    %v966 = vsub.f32 %v864, %v960
    %v967 = vsub.f32 %v869, %v960
    %v968 = vsub.f32 %v872, %v960
    %v969 = vsub.f32 %v877, %v960
    %v970 = vsub.f32 %v880, %v960
    %v971 = vsub.f32 %v885, %v960
    %v972 = vsub.f32 %v888, %v960
    %v973 = vsub.f32 %v893, %v960
    %v974 = vsub.f32 %v896, %v960
    %v975 = vsub.f32 %v901, %v960
    %v976 = vsub.f32 %v904, %v960
    %v977 = vsub.f32 %v909, %v960
    %v978 = vsub.f32 %v912, %v960
    %v979 = vsub.f32 %v917, %v960
    %v980 = vsub.f32 %v920, %v960
    %v981 = vmul.f32 %v965, 1.442695
    %v982 = vpow.pop %v981
    %v983 = vmul.f32 %v966, 1.442695
    %v984 = vpow.pop %v983
    %v985 = vmul.f32 %v967, 1.442695
    %v986 = vpow.pop %v985
    %v987 = vmul.f32 %v968, 1.442695
    %v988 = vpow.pop %v987
    %v989 = vmul.f32 %v969, 1.442695
    %v990 = vpow.pop %v989
    %v991 = vmul.f32 %v970, 1.442695
    %v992 = vpow.pop %v991
    %v993 = vmul.f32 %v971, 1.442695
    %v994 = vpow.pop %v993
    %v995 = vmul.f32 %v972, 1.442695
    %v996 = vpow.pop %v995
    %v997 = vmul.f32 %v973, 1.442695
    %v998 = vpow.pop %v997
    %v999 = vmul.f32 %v974, 1.442695
    %v1000 = vpow.pop %v999
    %v1001 = vmul.f32 %v975, 1.442695
    %v1002 = vpow.pop %v1001
    %v1003 = vmul.f32 %v976, 1.442695
    %v1004 = vpow.pop %v1003
    %v1005 = vmul.f32 %v977, 1.442695
    %v1006 = vpow.pop %v1005
    %v1007 = vmul.f32 %v978, 1.442695
    %v1008 = vpow.pop %v1007
    %v1009 = vmul.f32 %v979, 1.442695
    %v1010 = vpow.pop %v1009
    %v1011 = vmul.f32 %v980, 1.442695
    %v1012 = vpow.pop %v1011
    %v1013 = vsel %vm371, %v982, 0.0
    %v1014 = vsel %vm371, %v984, 0.0
    %v1015 = vadd.f32 %v1013, %v1014
    %v1016 = vsel %vm371, %v986, 0.0
    %v1017 = vadd.f32 %v1015, %v1016
    %v1018 = vsel %vm371, %v988, 0.0
    %v1019 = vadd.f32 %v1017, %v1018
    %v1020 = vsel %vm371, %v990, 0.0
    %v1021 = vadd.f32 %v1019, %v1020
    %v1022 = vsel %vm371, %v992, 0.0
    %v1023 = vadd.f32 %v1021, %v1022
    %v1024 = vsel %vm371, %v994, 0.0
    %v1025 = vadd.f32 %v1023, %v1024
    %v1026 = vsel %vm371, %v996, 0.0
    %v1027 = vadd.f32 %v1025, %v1026
    %v1028 = vsel %vm371, %v998, 0.0
    %v1029 = vadd.f32 %v1027, %v1028
    %v1030 = vsel %vm371, %v1000, 0.0
    %v1031 = vadd.f32 %v1029, %v1030
    %v1032 = vsel %vm371, %v1002, 0.0
    %v1033 = vadd.f32 %v1031, %v1032
    %v1034 = vsel %vm371, %v1004, 0.0
    %v1035 = vadd.f32 %v1033, %v1034
    %v1036 = vsel %vm371, %v1006, 0.0
    %v1037 = vadd.f32 %v1035, %v1036
    %v1038 = vsel %vm371, %v1008, 0.0
    %v1039 = vadd.f32 %v1037, %v1038
    %v1040 = vsel %vm371, %v1010, 0.0
    %v1041 = vadd.f32 %v1039, %v1040
    %v1042 = vsel %vm371, %v1012, 0.0
    %v1043 = vadd.f32 %v1041, %v1042
    %v1044 = vrot.slane %v1043, 4
    %v1045 = vadd.f32 %v1043, %v1044
    %v1046 = vrot.slane %v1045, 2
    %v1047 = vadd.f32 %v1045, %v1046
    %v1048 = vrot.slane %v1047, 1
    %v1049 = vadd.f32 %v1047, %v1048
    %v1050 = vadd.f32 %v964, %v1049
    %v1051 = vld [vmem:[%s4 + $0x80] sm:$0xf]
    %v1052 = vld [vmem:[%s4 + $0x84] sm:$0xf]
    %v1053 = vld [vmem:[%s4 + $0x88] sm:$0xf]
    %v1054 = vld [vmem:[%s4 + $0x8c] sm:$0xf]
    %v1055 = vld [vmem:[%s4 + $0x90] sm:$0xf]
    %v1056 = vld [vmem:[%s4 + $0x94] sm:$0xf]
    %v1057 = vld [vmem:[%s4 + $0x98] sm:$0xf]
    %v1058 = vld [vmem:[%s4 + $0x9c] sm:$0xf]
    %v1059 = vld [vmem:[%s4 + $0xa0] sm:$0xf]
    %v1060 = vld [vmem:[%s4 + $0xa4] sm:$0xf]
    %v1061 = vld [vmem:[%s4 + $0xa8] sm:$0xf]
    %v1062 = vld [vmem:[%s4 + $0xac] sm:$0xf]
    %v1063 = vld [vmem:[%s4 + $0xb0] sm:$0xf]
    %v1064 = vld [vmem:[%s4 + $0xb4] sm:$0xf]
    %v1065 = vld [vmem:[%s4 + $0xb8] sm:$0xf]
    %v1066 = vld [vmem:[%s4 + $0xbc] sm:$0xf]
    %v1083 = vunpack.c.l.b16 %v1051
    %v1084 = vunpack.c.l.b16 %v1052
    %v1085 = vunpack.c.l.b16 %v1053
    %v1086 = vunpack.c.l.b16 %v1054
    %v1087 = vunpack.c.l.b16 %v1055
    %v1088 = vunpack.c.l.b16 %v1056
    %v1089 = vunpack.c.l.b16 %v1057
    %v1090 = vunpack.c.l.b16 %v1058
    %v1091 = vunpack.c.l.b16 %v1059
    %v1092 = vunpack.c.l.b16 %v1060
    %v1093 = vunpack.c.l.b16 %v1061
    %v1094 = vunpack.c.l.b16 %v1062
    %v1095 = vunpack.c.l.b16 %v1063
    %v1096 = vunpack.c.l.b16 %v1064
    %v1097 = vunpack.c.l.b16 %v1065
    %v1098 = vunpack.c.l.b16 %v1066
    %v1099 = vpack.c.b16 %v1084, %v1083
    %v1100 = vpack.c.b16 %v1086, %v1085
    %v1101 = vpack.c.b16 %v1088, %v1087
    %v1102 = vpack.c.b16 %v1090, %v1089
    %v1103 = vpack.c.b16 %v1092, %v1091
    %v1104 = vpack.c.b16 %v1094, %v1093
    %v1105 = vpack.c.b16 %v1096, %v1095
    %v1106 = vpack.c.b16 %v1098, %v1097
    %v1108 = vsel %vm497, %v1099, 0
    %v1111 = vsel %vm497, %v1100, 0
    %v1114 = vsel %vm497, %v1101, 0
    %v1117 = vsel %vm497, %v1102, 0
    %v1120 = vsel %vm497, %v1103, 0
    %v1123 = vsel %vm497, %v1104, 0
    %v1126 = vsel %vm497, %v1105, 0
    %v1129 = vsel %vm497, %v1106, 0
    %1131 = vmatprep.subr.bf16.mxu0 0
    %1132 = vmatpush1.bf16.msra.mxu0 0
    %1133 = vmatprep.subr.bf16.mxu0 0
    %1134 = vmatpush1.bf16.msra.mxu0 0
    %1135 = vmatprep.subr.bf16.mxu0 0
    %1136 = vmatpush1.bf16.msra.mxu0 0
    %1137 = vmatprep.subr.bf16.mxu0 0
    %1138 = vmatpush1.bf16.msra.mxu0 0
    %1139 = vmatprep.subr.bf16.mxu0 0
    %1140 = vmatpush1.bf16.msra.mxu0 0
    %1141 = vmatprep.subr.bf16.mxu0 0
    %1142 = vmatpush1.bf16.msra.mxu0 0
    %1143 = vmatprep.subr.bf16.mxu0 0
    %1144 = vmatpush1.bf16.msra.mxu0 %v440
    %1145 = vmatprep.subr.bf16.mxu0 0
    %1146 = vmatpush1.bf16.msra.mxu0 %v439
    %1147 = vmatprep.subr.bf16.mxu0 0
    %1148 = vmatpush2.bf16.msra.mxu0 0
    %1149 = vmatprep.subr.bf16.mxu0 0
    %1150 = vmatpush2.bf16.msra.mxu0 0
    %1151 = vmatprep.subr.bf16.mxu0 0
    %1152 = vmatpush2.bf16.msra.mxu0 0
    %1153 = vmatprep.subr.bf16.mxu0 0
    %1154 = vmatpush2.bf16.msra.mxu0 0
    %1155 = vmatprep.subr.bf16.mxu0 0
    %1156 = vmatpush2.bf16.msra.mxu0 0
    %1157 = vmatprep.subr.bf16.mxu0 0
    %1158 = vmatpush2.bf16.msra.mxu0 0
    %1159 = vmatprep.subr.bf16.mxu0 0
    %1160 = vmatpush2.bf16.msra.mxu0 0
    %1161 = vmatprep.subr.bf16.mxu0 0
    %1162 = vmatpush2.bf16.msra.mxu0 0
    %1163 = vmatprep.mubr.bf16.mxu0 0
    %1164 = vmatmul.mubr.bf16.gmra.mxu0 %v1108
    %v1165 = vpop.f32.mrf.mxu0
    %v1166 = vadd.f32 0.0, %v1165
    %v1167 = vpop.f32.mrf.mxu0
    %v1168 = vpop.f32.mrf.mxu0
    %v1169 = vadd.f32 0.0, %v1168
    %v1170 = vpop.f32.mrf.mxu0
    %1171 = vmatprep.mubr.bf16.mxu0 0
    %1172 = vmatmul.mubr.bf16.gmra.mxu0 %v1111
    %v1173 = vpop.f32.mrf.mxu0
    %v1174 = vadd.f32 0.0, %v1173
    %v1175 = vpop.f32.mrf.mxu0
    %v1176 = vpop.f32.mrf.mxu0
    %v1177 = vadd.f32 0.0, %v1176
    %v1178 = vpop.f32.mrf.mxu0
    %1179 = vmatprep.mubr.bf16.mxu0 0
    %1180 = vmatmul.mubr.bf16.gmra.mxu0 %v1114
    %v1181 = vpop.f32.mrf.mxu0
    %v1182 = vadd.f32 0.0, %v1181
    %v1183 = vpop.f32.mrf.mxu0
    %v1184 = vpop.f32.mrf.mxu0
    %v1185 = vadd.f32 0.0, %v1184
    %v1186 = vpop.f32.mrf.mxu0
    %1187 = vmatprep.mubr.bf16.mxu0 0
    %1188 = vmatmul.mubr.bf16.gmra.mxu0 %v1117
    %v1189 = vpop.f32.mrf.mxu0
    %v1190 = vadd.f32 0.0, %v1189
    %v1191 = vpop.f32.mrf.mxu0
    %v1192 = vpop.f32.mrf.mxu0
    %v1193 = vadd.f32 0.0, %v1192
    %v1194 = vpop.f32.mrf.mxu0
    %1195 = vmatprep.mubr.bf16.mxu0 0
    %1196 = vmatmul.mubr.bf16.gmra.mxu0 %v1120
    %v1197 = vpop.f32.mrf.mxu0
    %v1198 = vadd.f32 0.0, %v1197
    %v1199 = vpop.f32.mrf.mxu0
    %v1200 = vpop.f32.mrf.mxu0
    %v1201 = vadd.f32 0.0, %v1200
    %v1202 = vpop.f32.mrf.mxu0
    %1203 = vmatprep.mubr.bf16.mxu0 0
    %1204 = vmatmul.mubr.bf16.gmra.mxu0 %v1123
    %v1205 = vpop.f32.mrf.mxu0
    %v1206 = vadd.f32 0.0, %v1205
    %v1207 = vpop.f32.mrf.mxu0
    %v1208 = vpop.f32.mrf.mxu0
    %v1209 = vadd.f32 0.0, %v1208
    %v1210 = vpop.f32.mrf.mxu0
    %1211 = vmatprep.mubr.bf16.mxu0 0
    %1212 = vmatmul.mubr.bf16.gmra.mxu0 %v1126
    %v1213 = vpop.f32.mrf.mxu0
    %v1214 = vadd.f32 0.0, %v1213
    %v1215 = vpop.f32.mrf.mxu0
    %v1216 = vpop.f32.mrf.mxu0
    %v1217 = vadd.f32 0.0, %v1216
    %v1218 = vpop.f32.mrf.mxu0
    %1219 = vmatprep.mubr.bf16.mxu0 0
    %1220 = vmatmul.mubr.bf16.gmra.mxu0 %v1129
    %v1221 = vpop.f32.mrf.mxu0
    %v1222 = vadd.f32 0.0, %v1221
    %v1223 = vpop.f32.mrf.mxu0
    %v1224 = vpop.f32.mrf.mxu0
    %v1225 = vadd.f32 0.0, %v1224
    %v1226 = vpop.f32.mrf.mxu0
    %1227 = vdwg.mxu0
    %v1228 = vsel %vm371, %v1166, -inf
    %v1229 = vsel %vm371, %v1169, -inf
    %v1230 = vsel %vm371, %v1174, -inf
    %v1231 = vsel %vm371, %v1177, -inf
    %v1232 = vsel %vm371, %v1182, -inf
    %v1233 = vmax.f32 %v1228, %v1232
    %v1234 = vsel %vm371, %v1185, -inf
    %v1235 = vmax.f32 %v1229, %v1234
    %v1236 = vsel %vm371, %v1190, -inf
    %v1237 = vmax.f32 %v1230, %v1236
    %v1238 = vsel %vm371, %v1193, -inf
    %v1239 = vmax.f32 %v1231, %v1238
    %v1240 = vsel %vm371, %v1198, -inf
    %v1241 = vmax.f32 %v1233, %v1240
    %v1242 = vsel %vm371, %v1201, -inf
    %v1243 = vmax.f32 %v1235, %v1242
    %v1244 = vsel %vm371, %v1206, -inf
    %v1245 = vmax.f32 %v1237, %v1244
    %v1246 = vsel %vm371, %v1209, -inf
    %v1247 = vmax.f32 %v1239, %v1246
    %v1248 = vsel %vm371, %v1214, -inf
    %v1249 = vmax.f32 %v1241, %v1248
    %v1250 = vsel %vm371, %v1217, -inf
    %v1251 = vmax.f32 %v1243, %v1250
    %v1252 = vsel %vm371, %v1222, -inf
    %v1253 = vmax.f32 %v1245, %v1252
    %v1254 = vsel %vm371, %v1225, -inf
    %v1255 = vmax.f32 %v1247, %v1254
    %v1256 = vmax.f32 %v1249, %v1251
    %v1257 = vmax.f32 %v1253, %v1255
    %v1258 = vmax.f32 %v1256, %v1257
    %v1259 = vrot.slane %v1258, 4
    %v1260 = vmax.f32 %v1258, %v1259
    %v1261 = vrot.slane %v1260, 2
    %v1262 = vmax.f32 %v1260, %v1261
    %v1263 = vrot.slane %v1262, 1
    %v1264 = vmax.f32 %v1262, %v1263
    %v1265 = vmax.f32 %v960, %v1264
    %v1266 = vsub.f32 %v960, %v1265
    %v1267 = vmul.f32 %v1266, 1.442695
    %v1268 = vpow.pop %v1267
    %v1269 = vmul.f32 %v1050, %v1268
    %v1270 = vsub.f32 %v1166, %v1265
    %v1271 = vsub.f32 %v1169, %v1265
    %v1272 = vsub.f32 %v1174, %v1265
    %v1273 = vsub.f32 %v1177, %v1265
    %v1274 = vsub.f32 %v1182, %v1265
    %v1275 = vsub.f32 %v1185, %v1265
    %v1276 = vsub.f32 %v1190, %v1265
    %v1277 = vsub.f32 %v1193, %v1265
    %v1278 = vsub.f32 %v1198, %v1265
    %v1279 = vsub.f32 %v1201, %v1265
    %v1280 = vsub.f32 %v1206, %v1265
    %v1281 = vsub.f32 %v1209, %v1265
    %v1282 = vsub.f32 %v1214, %v1265
    %v1283 = vsub.f32 %v1217, %v1265
    %v1284 = vsub.f32 %v1222, %v1265
    %v1285 = vsub.f32 %v1225, %v1265
    %v1286 = vmul.f32 %v1270, 1.442695
    %v1287 = vpow.pop %v1286
    %v1288 = vmul.f32 %v1271, 1.442695
    %v1289 = vpow.pop %v1288
    %v1290 = vmul.f32 %v1272, 1.442695
    %v1291 = vpow.pop %v1290
    %v1292 = vmul.f32 %v1273, 1.442695
    %v1293 = vpow.pop %v1292
    %v1294 = vmul.f32 %v1274, 1.442695
    %v1295 = vpow.pop %v1294
    %v1296 = vmul.f32 %v1275, 1.442695
    %v1297 = vpow.pop %v1296
    %v1298 = vmul.f32 %v1276, 1.442695
    %v1299 = vpow.pop %v1298
    %v1300 = vmul.f32 %v1277, 1.442695
    %v1301 = vpow.pop %v1300
    %v1302 = vmul.f32 %v1278, 1.442695
    %v1303 = vpow.pop %v1302
    %v1304 = vmul.f32 %v1279, 1.442695
    %v1305 = vpow.pop %v1304
    %v1306 = vmul.f32 %v1280, 1.442695
    %v1307 = vpow.pop %v1306
    %v1308 = vmul.f32 %v1281, 1.442695
    %v1309 = vpow.pop %v1308
    %v1310 = vmul.f32 %v1282, 1.442695
    %v1311 = vpow.pop %v1310
    %v1312 = vmul.f32 %v1283, 1.442695
    %v1313 = vpow.pop %v1312
    %v1314 = vmul.f32 %v1284, 1.442695
    %v1315 = vpow.pop %v1314
    %v1316 = vmul.f32 %v1285, 1.442695
    %v1317 = vpow.pop %v1316
    %v1318 = vsel %vm371, %v1287, 0.0
    %v1319 = vsel %vm371, %v1289, 0.0
    %v1320 = vadd.f32 %v1318, %v1319
    %v1321 = vsel %vm371, %v1291, 0.0
    %v1322 = vadd.f32 %v1320, %v1321
    %v1323 = vsel %vm371, %v1293, 0.0
    %v1324 = vadd.f32 %v1322, %v1323
    %v1325 = vsel %vm371, %v1295, 0.0
    %v1326 = vadd.f32 %v1324, %v1325
    %v1327 = vsel %vm371, %v1297, 0.0
    %v1328 = vadd.f32 %v1326, %v1327
    %v1329 = vsel %vm371, %v1299, 0.0
    %v1330 = vadd.f32 %v1328, %v1329
    %v1331 = vsel %vm371, %v1301, 0.0
    %v1332 = vadd.f32 %v1330, %v1331
    %v1333 = vsel %vm371, %v1303, 0.0
    %v1334 = vadd.f32 %v1332, %v1333
    %v1335 = vsel %vm371, %v1305, 0.0
    %v1336 = vadd.f32 %v1334, %v1335
    %v1337 = vsel %vm371, %v1307, 0.0
    %v1338 = vadd.f32 %v1336, %v1337
    %v1339 = vsel %vm371, %v1309, 0.0
    %v1340 = vadd.f32 %v1338, %v1339
    %v1341 = vsel %vm371, %v1311, 0.0
    %v1342 = vadd.f32 %v1340, %v1341
    %v1343 = vsel %vm371, %v1313, 0.0
    %v1344 = vadd.f32 %v1342, %v1343
    %v1345 = vsel %vm371, %v1315, 0.0
    %v1346 = vadd.f32 %v1344, %v1345
    %v1347 = vsel %vm371, %v1317, 0.0
    %v1348 = vadd.f32 %v1346, %v1347
    %v1349 = vrot.slane %v1348, 4
    %v1350 = vadd.f32 %v1348, %v1349
    %v1351 = vrot.slane %v1350, 2
    %v1352 = vadd.f32 %v1350, %v1351
    %v1353 = vrot.slane %v1352, 1
    %v1354 = vadd.f32 %v1352, %v1353
    %v1355 = vadd.f32 %v1269, %v1354
    %v1356 = vld [vmem:[%s4 + $0xc0] sm:$0xf]
    %v1357 = vld [vmem:[%s4 + $0xc4] sm:$0xf]
    %v1358 = vld [vmem:[%s4 + $0xc8] sm:$0xf]
    %v1359 = vld [vmem:[%s4 + $0xcc] sm:$0xf]
    %v1360 = vld [vmem:[%s4 + $0xd0] sm:$0xf]
    %v1361 = vld [vmem:[%s4 + $0xd4] sm:$0xf]
    %v1362 = vld [vmem:[%s4 + $0xd8] sm:$0xf]
    %v1363 = vld [vmem:[%s4 + $0xdc] sm:$0xf]
    %v1364 = vld [vmem:[%s4 + $0xe0] sm:$0xf]
    %v1365 = vld [vmem:[%s4 + $0xe4] sm:$0xf]
    %v1366 = vld [vmem:[%s4 + $0xe8] sm:$0xf]
    %v1367 = vld [vmem:[%s4 + $0xec] sm:$0xf]
    %v1368 = vld [vmem:[%s4 + $0xf0] sm:$0xf]
    %v1369 = vld [vmem:[%s4 + $0xf4] sm:$0xf]
    %v1370 = vld [vmem:[%s4 + $0xf8] sm:$0xf]
    %v1371 = vld [vmem:[%s4 + $0xfc] sm:$0xf]
    %v1388 = vunpack.c.l.b16 %v1356
    %v1389 = vunpack.c.l.b16 %v1357
    %v1390 = vunpack.c.l.b16 %v1358
    %v1391 = vunpack.c.l.b16 %v1359
    %v1392 = vunpack.c.l.b16 %v1360
    %v1393 = vunpack.c.l.b16 %v1361
    %v1394 = vunpack.c.l.b16 %v1362
    %v1395 = vunpack.c.l.b16 %v1363
    %v1396 = vunpack.c.l.b16 %v1364
    %v1397 = vunpack.c.l.b16 %v1365
    %v1398 = vunpack.c.l.b16 %v1366
    %v1399 = vunpack.c.l.b16 %v1367
    %v1400 = vunpack.c.l.b16 %v1368
    %v1401 = vunpack.c.l.b16 %v1369
    %v1402 = vunpack.c.l.b16 %v1370
    %v1403 = vunpack.c.l.b16 %v1371
    %v1404 = vpack.c.b16 %v1389, %v1388
    %v1405 = vpack.c.b16 %v1391, %v1390
    %v1406 = vpack.c.b16 %v1393, %v1392
    %v1407 = vpack.c.b16 %v1395, %v1394
    %v1408 = vpack.c.b16 %v1397, %v1396
    %v1409 = vpack.c.b16 %v1399, %v1398
    %v1410 = vpack.c.b16 %v1401, %v1400
    %v1411 = vpack.c.b16 %v1403, %v1402
    %v1413 = vsel %vm497, %v1404, 0
    %v1416 = vsel %vm497, %v1405, 0
    %v1419 = vsel %vm497, %v1406, 0
    %v1422 = vsel %vm497, %v1407, 0
    %v1425 = vsel %vm497, %v1408, 0
    %v1428 = vsel %vm497, %v1409, 0
    %v1431 = vsel %vm497, %v1410, 0
    %v1434 = vsel %vm497, %v1411, 0
    %1436 = vmatprep.subr.bf16.mxu0 0
    %1437 = vmatpush1.bf16.msra.mxu0 0
    %1438 = vmatprep.subr.bf16.mxu0 0
    %1439 = vmatpush1.bf16.msra.mxu0 0
    %1440 = vmatprep.subr.bf16.mxu0 0
    %1441 = vmatpush1.bf16.msra.mxu0 0
    %1442 = vmatprep.subr.bf16.mxu0 0
    %1443 = vmatpush1.bf16.msra.mxu0 0
    %1444 = vmatprep.subr.bf16.mxu0 0
    %1445 = vmatpush1.bf16.msra.mxu0 0
    %1446 = vmatprep.subr.bf16.mxu0 0
    %1447 = vmatpush1.bf16.msra.mxu0 0
    %1448 = vmatprep.subr.bf16.mxu0 0
    %1449 = vmatpush1.bf16.msra.mxu0 %v440
    %1450 = vmatprep.subr.bf16.mxu0 0
    %1451 = vmatpush1.bf16.msra.mxu0 %v439
    %1452 = vmatprep.subr.bf16.mxu0 0
    %1453 = vmatpush2.bf16.msra.mxu0 0
    %1454 = vmatprep.subr.bf16.mxu0 0
    %1455 = vmatpush2.bf16.msra.mxu0 0
    %1456 = vmatprep.subr.bf16.mxu0 0
    %1457 = vmatpush2.bf16.msra.mxu0 0
    %1458 = vmatprep.subr.bf16.mxu0 0
    %1459 = vmatpush2.bf16.msra.mxu0 0
    %1460 = vmatprep.subr.bf16.mxu0 0
    %1461 = vmatpush2.bf16.msra.mxu0 0
    %1462 = vmatprep.subr.bf16.mxu0 0
    %1463 = vmatpush2.bf16.msra.mxu0 0
    %1464 = vmatprep.subr.bf16.mxu0 0
    %1465 = vmatpush2.bf16.msra.mxu0 0
    %1466 = vmatprep.subr.bf16.mxu0 0
    %1467 = vmatpush2.bf16.msra.mxu0 0
    %1468 = vmatprep.mubr.bf16.mxu0 0
    %1469 = vmatmul.mubr.bf16.gmra.mxu0 %v1413
    %v1470 = vpop.f32.mrf.mxu0
    %v1471 = vadd.f32 0.0, %v1470
    %v1472 = vpop.f32.mrf.mxu0
    %v1473 = vpop.f32.mrf.mxu0
    %v1474 = vadd.f32 0.0, %v1473
    %v1475 = vpop.f32.mrf.mxu0
    %1476 = vmatprep.mubr.bf16.mxu0 0
    %1477 = vmatmul.mubr.bf16.gmra.mxu0 %v1416
    %v1478 = vpop.f32.mrf.mxu0
    %v1479 = vadd.f32 0.0, %v1478
    %v1480 = vpop.f32.mrf.mxu0
    %v1481 = vpop.f32.mrf.mxu0
    %v1482 = vadd.f32 0.0, %v1481
    %v1483 = vpop.f32.mrf.mxu0
    %1484 = vmatprep.mubr.bf16.mxu0 0
    %1485 = vmatmul.mubr.bf16.gmra.mxu0 %v1419
    %v1486 = vpop.f32.mrf.mxu0
    %v1487 = vadd.f32 0.0, %v1486
    %v1488 = vpop.f32.mrf.mxu0
    %v1489 = vpop.f32.mrf.mxu0
    %v1490 = vadd.f32 0.0, %v1489
    %v1491 = vpop.f32.mrf.mxu0
    %1492 = vmatprep.mubr.bf16.mxu0 0
    %1493 = vmatmul.mubr.bf16.gmra.mxu0 %v1422
    %v1494 = vpop.f32.mrf.mxu0
    %v1495 = vadd.f32 0.0, %v1494
    %v1496 = vpop.f32.mrf.mxu0
    %v1497 = vpop.f32.mrf.mxu0
    %v1498 = vadd.f32 0.0, %v1497
    %v1499 = vpop.f32.mrf.mxu0
    %1500 = vmatprep.mubr.bf16.mxu0 0
    %1501 = vmatmul.mubr.bf16.gmra.mxu0 %v1425
    %v1502 = vpop.f32.mrf.mxu0
    %v1503 = vadd.f32 0.0, %v1502
    %v1504 = vpop.f32.mrf.mxu0
    %v1505 = vpop.f32.mrf.mxu0
    %v1506 = vadd.f32 0.0, %v1505
    %v1507 = vpop.f32.mrf.mxu0
    %1508 = vmatprep.mubr.bf16.mxu0 0
    %1509 = vmatmul.mubr.bf16.gmra.mxu0 %v1428
    %v1510 = vpop.f32.mrf.mxu0
    %v1511 = vadd.f32 0.0, %v1510
    %v1512 = vpop.f32.mrf.mxu0
    %v1513 = vpop.f32.mrf.mxu0
    %v1514 = vadd.f32 0.0, %v1513
    %v1515 = vpop.f32.mrf.mxu0
    %1516 = vmatprep.mubr.bf16.mxu0 0
    %1517 = vmatmul.mubr.bf16.gmra.mxu0 %v1431
    %v1518 = vpop.f32.mrf.mxu0
    %v1519 = vadd.f32 0.0, %v1518
    %v1520 = vpop.f32.mrf.mxu0
    %v1521 = vpop.f32.mrf.mxu0
    %v1522 = vadd.f32 0.0, %v1521
    %v1523 = vpop.f32.mrf.mxu0
    %1524 = vmatprep.mubr.bf16.mxu0 0
    %1525 = vmatmul.mubr.bf16.gmra.mxu0 %v1434
    %v1526 = vpop.f32.mrf.mxu0
    %v1527 = vadd.f32 0.0, %v1526
    %v1528 = vpop.f32.mrf.mxu0
    %v1529 = vpop.f32.mrf.mxu0
    %v1530 = vadd.f32 0.0, %v1529
    %v1531 = vpop.f32.mrf.mxu0
    %1532 = vdwg.mxu0
    %v1533 = vsel %vm371, %v1471, -inf
    %v1534 = vsel %vm371, %v1474, -inf
    %v1535 = vsel %vm371, %v1479, -inf
    %v1536 = vsel %vm371, %v1482, -inf
    %v1537 = vsel %vm371, %v1487, -inf
    %v1538 = vmax.f32 %v1533, %v1537
    %v1539 = vsel %vm371, %v1490, -inf
    %v1540 = vmax.f32 %v1534, %v1539
    %v1541 = vsel %vm371, %v1495, -inf
    %v1542 = vmax.f32 %v1535, %v1541
    %v1543 = vsel %vm371, %v1498, -inf
    %v1544 = vmax.f32 %v1536, %v1543
    %v1545 = vsel %vm371, %v1503, -inf
    %v1546 = vmax.f32 %v1538, %v1545
    %v1547 = vsel %vm371, %v1506, -inf
    %v1548 = vmax.f32 %v1540, %v1547
    %v1549 = vsel %vm371, %v1511, -inf
    %v1550 = vmax.f32 %v1542, %v1549
    %v1551 = vsel %vm371, %v1514, -inf
    %v1552 = vmax.f32 %v1544, %v1551
    %v1553 = vsel %vm371, %v1519, -inf
    %v1554 = vmax.f32 %v1546, %v1553
    %v1555 = vsel %vm371, %v1522, -inf
    %v1556 = vmax.f32 %v1548, %v1555
    %v1557 = vsel %vm371, %v1527, -inf
    %v1558 = vmax.f32 %v1550, %v1557
    %v1559 = vsel %vm371, %v1530, -inf
    %v1560 = vmax.f32 %v1552, %v1559
    %v1561 = vmax.f32 %v1554, %v1556
    %v1562 = vmax.f32 %v1558, %v1560
    %v1563 = vmax.f32 %v1561, %v1562
    %v1564 = vrot.slane %v1563, 4
    %v1565 = vmax.f32 %v1563, %v1564
    %v1566 = vrot.slane %v1565, 2
    %v1567 = vmax.f32 %v1565, %v1566
    %v1568 = vrot.slane %v1567, 1
    %v1569 = vmax.f32 %v1567, %v1568
    %v1570 = vmax.f32 %v1265, %v1569
    %v1571 = vsub.f32 %v1265, %v1570
    %v1572 = vmul.f32 %v1571, 1.442695
    %v1573 = vpow.pop %v1572
    %v1574 = vmul.f32 %v1355, %v1573
    %v1575 = vsub.f32 %v1471, %v1570
    %v1576 = vsub.f32 %v1474, %v1570
    %v1577 = vsub.f32 %v1479, %v1570
    %v1578 = vsub.f32 %v1482, %v1570
    %v1579 = vsub.f32 %v1487, %v1570
    %v1580 = vsub.f32 %v1490, %v1570
    %v1581 = vsub.f32 %v1495, %v1570
    %v1582 = vsub.f32 %v1498, %v1570
    %v1583 = vsub.f32 %v1503, %v1570
    %v1584 = vsub.f32 %v1506, %v1570
    %v1585 = vsub.f32 %v1511, %v1570
    %v1586 = vsub.f32 %v1514, %v1570
    %v1587 = vsub.f32 %v1519, %v1570
    %v1588 = vsub.f32 %v1522, %v1570
    %v1589 = vsub.f32 %v1527, %v1570
    %v1590 = vsub.f32 %v1530, %v1570
    %v1591 = vmul.f32 %v1575, 1.442695
    %v1592 = vpow.pop %v1591
    %v1593 = vmul.f32 %v1576, 1.442695
    %v1594 = vpow.pop %v1593
    %v1595 = vmul.f32 %v1577, 1.442695
    %v1596 = vpow.pop %v1595
    %v1597 = vmul.f32 %v1578, 1.442695
    %v1598 = vpow.pop %v1597
    %v1599 = vmul.f32 %v1579, 1.442695
    %v1600 = vpow.pop %v1599
    %v1601 = vmul.f32 %v1580, 1.442695
    %v1602 = vpow.pop %v1601
    %v1603 = vmul.f32 %v1581, 1.442695
    %v1604 = vpow.pop %v1603
    %v1605 = vmul.f32 %v1582, 1.442695
    %v1606 = vpow.pop %v1605
    %v1607 = vmul.f32 %v1583, 1.442695
    %v1608 = vpow.pop %v1607
    %v1609 = vmul.f32 %v1584, 1.442695
    %v1610 = vpow.pop %v1609
    %v1611 = vmul.f32 %v1585, 1.442695
    %v1612 = vpow.pop %v1611
    %v1613 = vmul.f32 %v1586, 1.442695
    %v1614 = vpow.pop %v1613
    %v1615 = vmul.f32 %v1587, 1.442695
    %v1616 = vpow.pop %v1615
    %v1617 = vmul.f32 %v1588, 1.442695
    %v1618 = vpow.pop %v1617
    %v1619 = vmul.f32 %v1589, 1.442695
    %v1620 = vpow.pop %v1619
    %v1621 = vmul.f32 %v1590, 1.442695
    %v1622 = vpow.pop %v1621
    %v1623 = vsel %vm371, %v1592, 0.0
    %v1624 = vsel %vm371, %v1594, 0.0
    %v1625 = vadd.f32 %v1623, %v1624
    %v1626 = vsel %vm371, %v1596, 0.0
    %v1627 = vadd.f32 %v1625, %v1626
    %v1628 = vsel %vm371, %v1598, 0.0
    %v1629 = vadd.f32 %v1627, %v1628
    %v1630 = vsel %vm371, %v1600, 0.0
    %v1631 = vadd.f32 %v1629, %v1630
    %v1632 = vsel %vm371, %v1602, 0.0
    %v1633 = vadd.f32 %v1631, %v1632
    %v1634 = vsel %vm371, %v1604, 0.0
    %v1635 = vadd.f32 %v1633, %v1634
    %v1636 = vsel %vm371, %v1606, 0.0
    %v1637 = vadd.f32 %v1635, %v1636
    %v1638 = vsel %vm371, %v1608, 0.0
    %v1639 = vadd.f32 %v1637, %v1638
    %v1640 = vsel %vm371, %v1610, 0.0
    %v1641 = vadd.f32 %v1639, %v1640
    %v1642 = vsel %vm371, %v1612, 0.0
    %v1643 = vadd.f32 %v1641, %v1642
    %v1644 = vsel %vm371, %v1614, 0.0
    %v1645 = vadd.f32 %v1643, %v1644
    %v1646 = vsel %vm371, %v1616, 0.0
    %v1647 = vadd.f32 %v1645, %v1646
    %v1648 = vsel %vm371, %v1618, 0.0
    %v1649 = vadd.f32 %v1647, %v1648
    %v1650 = vsel %vm371, %v1620, 0.0
    %v1651 = vadd.f32 %v1649, %v1650
    %v1652 = vsel %vm371, %v1622, 0.0
    %v1653 = vadd.f32 %v1651, %v1652
    %v1654 = vrot.slane %v1653, 4
    %v1655 = vadd.f32 %v1653, %v1654
    %v1656 = vrot.slane %v1655, 2
    %v1657 = vadd.f32 %v1655, %v1656
    %v1658 = vrot.slane %v1657, 1
    %v1659 = vadd.f32 %v1657, %v1658
    %v1660 = vadd.f32 %v1574, %v1659
    %v1661 = vlog2.pop %v1660
    %v1662 = vmul.f32 %v1661, 0.6931472
    %v1663 = vadd.f32 %v1570, %v1662
    %v1664 = vsub.f32 %v1663, %v438
    %v1665 = vmul.f32 %v1664, %v408
    %vm1666 = vcmask 393216
    %v1667 = vsel %vm1666, %v1665, 0.0
    %1668 = vadd.xlane.f32.xlu0 %v1667
    %v1669 = vpop.xlane.xlu0 %1668
    %v1670 = vrot.slane %v1669, 4
    %v1671 = vadd.f32 %v1669, %v1670
    %v1672 = vrot.slane %v1671, 2
    %v1673 = vadd.f32 %v1671, %v1672
    %v1674 = vrot.slane %v1673, 1
    %v1675 = vadd.f32 %v1673, %v1674
    %s1676 = vtos %v1675
    %v1677 = vstv %s1676
    %v1678 = vadd.f32 %v1677, 0.0
    %v1679 = vsel %vm1666, %v408, 0.0
    %1680 = vadd.xlane.f32.xlu0 %v1679
    %v1681 = vpop.xlane.xlu0 %1680
    %v1682 = vrot.slane %v1681, 4
    %v1683 = vadd.f32 %v1681, %v1682
    %v1684 = vrot.slane %v1683, 2
    %v1685 = vadd.f32 %v1683, %v1684
    %v1686 = vrot.slane %v1685, 1
    %v1687 = vadd.f32 %v1685, %v1686
    %s1688 = vtos %v1687
    %v1689 = vstv %s1688
    %v1690 = vadd.f32 %v1689, 0.0
    %v1691 = vsel %vm165, %v122, 0
    %1693 = vmatprep.subr.mxu0 0.0
    %1694 = vmatpush1.msra.mxu0 %v37
    %1695 = vmatprep.subr.mxu0 0.0
    %1696 = vmatpush1.msra.mxu0 %v36
    %1697 = vmatprep.subr.mxu0 0.0
    %1698 = vmatpush1.msra.mxu0 %v35
    %1699 = vmatprep.subr.mxu0 0.0
    %1700 = vmatpush1.msra.mxu0 %v34
    %1701 = vmatprep.subr.mxu0 0.0
    %1702 = vmatpush1.msra.mxu0 %v33
    %1703 = vmatprep.subr.mxu0 0.0
    %1704 = vmatpush1.msra.mxu0 %v32
    %1705 = vmatprep.subr.mxu0 0.0
    %1706 = vmatpush1.msra.mxu0 %v31
    %1707 = vmatprep.subr.mxu0 0.0
    %1708 = vmatpush1.msra.mxu0 %v30
    %1709 = vmatprep.subr.mxu0 0.0
    %1710 = vmatpush1.msra.mxu0 %v29
    %1711 = vmatprep.subr.mxu0 0.0
    %1712 = vmatpush1.msra.mxu0 %v28
    %1713 = vmatprep.subr.mxu0 0.0
    %1714 = vmatpush1.msra.mxu0 %v27
    %1715 = vmatprep.subr.mxu0 0.0
    %1716 = vmatpush1.msra.mxu0 %v26
    %1717 = vmatprep.subr.mxu0 0.0
    %1718 = vmatpush1.msra.mxu0 %v25
    %1719 = vmatprep.subr.mxu0 0.0
    %1720 = vmatpush1.msra.mxu0 %v24
    %1721 = vmatprep.subr.mxu0 0.0
    %1722 = vmatpush1.msra.mxu0 %v23
    %1723 = vmatprep.subr.mxu0 0.0
    %1724 = vmatpush1.msra.mxu0 %v22
    %1725 = vmatprep.subr.mxu0 0.0
    %1726 = vmatpush2.msra.mxu0 0.0
    %1727 = vmatprep.subr.mxu0 0.0
    %1728 = vmatpush2.msra.mxu0 0.0
    %1729 = vmatprep.subr.mxu0 0.0
    %1730 = vmatpush2.msra.mxu0 0.0
    %1731 = vmatprep.subr.mxu0 0.0
    %1732 = vmatpush2.msra.mxu0 0.0
    %1733 = vmatprep.subr.mxu0 0.0
    %1734 = vmatpush2.msra.mxu0 0.0
    %1735 = vmatprep.subr.mxu0 0.0
    %1736 = vmatpush2.msra.mxu0 0.0
    %1737 = vmatprep.subr.mxu0 0.0
    %1738 = vmatpush2.msra.mxu0 0.0
    %1739 = vmatprep.subr.mxu0 0.0
    %1740 = vmatpush2.msra.mxu0 %v295
    %1741 = vmatprep.subr.mxu0 0.0
    %1742 = vmatpush2.msra.mxu0 %v45
    %1743 = vmatprep.subr.mxu0 0.0
    %1744 = vmatpush2.msra.mxu0 %v44
    %1745 = vmatprep.subr.mxu0 0.0
    %1746 = vmatpush2.msra.mxu0 %v43
    %1747 = vmatprep.subr.mxu0 0.0
    %1748 = vmatpush2.msra.mxu0 %v42
    %1749 = vmatprep.subr.mxu0 0.0
    %1750 = vmatpush2.msra.mxu0 %v41
    %1751 = vmatprep.subr.mxu0 0.0
    %1752 = vmatpush2.msra.mxu0 %v40
    %1753 = vmatprep.subr.mxu0 0.0
    %1754 = vmatpush2.msra.mxu0 %v39
    %1755 = vmatprep.subr.mxu0 0.0
    %1756 = vmatpush2.msra.mxu0 %v38
    %1757 = vmatprep.mubr.f32.mxu0 %v1691
    %1758 = vmatmul.mubr.f32.gmra.mxu0 %v118
    %v1759 = vpop.f32.mrf.mxu0
    %v1760 = vadd.f32 0.0, %v1759
    %v1761 = vpop.f32.mrf.mxu0
    %1762 = vdwg.mxu0
    %v1763 = vmul.f32 %v261, %v261
    %v1764 = vmul.f32 %v264, %v264
    %v1765 = vmul.f32 %v269, %v269
    %v1766 = vmul.f32 %v272, %v272
    %v1767 = vsel %vm371, %v1763, 0.0
    %v1768 = vsel %vm371, %v1764, 0.0
    %v1769 = vadd.f32 %v1767, %v1768
    %v1770 = vsel %vm371, %v1765, 0.0
    %v1771 = vadd.f32 %v1769, %v1770
    %v1772 = vsel %vm371, %v1766, 0.0
    %v1773 = vadd.f32 %v1771, %v1772
    %v1774 = vrot.slane %v1773, 4
    %v1775 = vadd.f32 %v1773, %v1774
    %v1776 = vrot.slane %v1775, 2
    %v1777 = vadd.f32 %v1775, %v1776
    %v1778 = vrot.slane %v1777, 1
    %v1779 = vadd.f32 %v1777, %v1778
    %v1780 = vmul.f32 %v277, %v277
    %v1781 = vmul.f32 %v280, %v280
    %v1782 = vmul.f32 %v285, %v285
    %v1783 = vmul.f32 %v288, %v288
    %v1784 = vsel %vm371, %v1780, 0.0
    %v1785 = vsel %vm371, %v1781, 0.0
    %v1786 = vadd.f32 %v1784, %v1785
    %v1787 = vsel %vm371, %v1782, 0.0
    %v1788 = vadd.f32 %v1786, %v1787
    %v1789 = vsel %vm371, %v1783, 0.0
    %v1790 = vadd.f32 %v1788, %v1789
    %v1791 = vrot.slane %v1790, 4
    %v1792 = vadd.f32 %v1790, %v1791
    %v1793 = vrot.slane %v1792, 2
    %v1794 = vadd.f32 %v1792, %v1793
    %v1795 = vrot.slane %v1794, 1
    %v1796 = vadd.f32 %v1794, %v1795
    %vm1797 = vcmp.gt.f32.partialorder %v1779, 0.0
    %vm1798 = vcmp.gt.f32.partialorder %v1796, 0.0
    %vm1799 = vmand %vm1797, %vm1798
    %vm1800 = vcmp.ge.f32.partialorder %v1760, 0.2
    %vm1801 = vmand %vm1799, %vm1800
    %v1802 = vsel %vm1801, 1, 0
    %v1803 = vcvt.s32.f32 %v1802
    %v1804 = vsel %vm1797, %v1779, 1.0
    %v1805 = vrsqrt.pop %v1804
    %v1806 = vsel %vm1798, %v1796, 1.0
    %v1807 = vrsqrt.pop %v1806
    %v1808 = vmul.f32 %v1805, 3.3333333
    %v1809 = vmul.f32 %v261, %v1808
    %v1810 = vmul.f32 %v264, %v1808
    %v1811 = vmul.f32 %v269, %v1808
    %v1812 = vmul.f32 %v272, %v1808
    %v1813 = vmul.f32 %v277, %v1807
    %v1814 = vmul.f32 %v280, %v1807
    %v1815 = vmul.f32 %v285, %v1807
    %v1816 = vmul.f32 %v288, %v1807
    %v1817 = vmul.f32 %v1809, %v1813
    %v1818 = vmul.f32 %v1810, %v1814
    %v1819 = vmul.f32 %v1811, %v1815
    %v1820 = vmul.f32 %v1812, %v1816
    %v1821 = vsel %vm371, %v1817, 0.0
    %v1822 = vsel %vm371, %v1818, 0.0
    %v1823 = vadd.f32 %v1821, %v1822
    %v1824 = vsel %vm371, %v1819, 0.0
    %v1825 = vadd.f32 %v1823, %v1824
    %v1826 = vsel %vm371, %v1820, 0.0
    %v1827 = vadd.f32 %v1825, %v1826
    %v1828 = vrot.slane %v1827, 4
    %v1829 = vadd.f32 %v1827, %v1828
    %v1830 = vrot.slane %v1829, 2
    %v1831 = vadd.f32 %v1829, %v1830
    %v1832 = vrot.slane %v1831, 1
    %v1833 = vadd.f32 %v1831, %v1832
    %v1834 = vpack.c.bf16 %v1810, %v1809
    %v1835 = vpack.c.bf16 %v1812, %v1811
    %1836 = vmatprep.subr.bf16.mxu0 0
    %1837 = vmatpush1.bf16.msra.mxu0 0
    %1838 = vmatprep.subr.bf16.mxu0 0
    %1839 = vmatpush1.bf16.msra.mxu0 0
    %1840 = vmatprep.subr.bf16.mxu0 0
    %1841 = vmatpush1.bf16.msra.mxu0 0
    %1842 = vmatprep.subr.bf16.mxu0 0
    %1843 = vmatpush1.bf16.msra.mxu0 0
    %1844 = vmatprep.subr.bf16.mxu0 0
    %1845 = vmatpush1.bf16.msra.mxu0 0
    %1846 = vmatprep.subr.bf16.mxu0 0
    %1847 = vmatpush1.bf16.msra.mxu0 0
    %1848 = vmatprep.subr.bf16.mxu0 0
    %1849 = vmatpush1.bf16.msra.mxu0 %v1835
    %1850 = vmatprep.subr.bf16.mxu0 0
    %1851 = vmatpush1.bf16.msra.mxu0 %v1834
    %1852 = vmatprep.subr.bf16.mxu0 0
    %1853 = vmatpush2.bf16.msra.mxu0 0
    %1854 = vmatprep.subr.bf16.mxu0 0
    %1855 = vmatpush2.bf16.msra.mxu0 0
    %1856 = vmatprep.subr.bf16.mxu0 0
    %1857 = vmatpush2.bf16.msra.mxu0 0
    %1858 = vmatprep.subr.bf16.mxu0 0
    %1859 = vmatpush2.bf16.msra.mxu0 0
    %1860 = vmatprep.subr.bf16.mxu0 0
    %1861 = vmatpush2.bf16.msra.mxu0 0
    %1862 = vmatprep.subr.bf16.mxu0 0
    %1863 = vmatpush2.bf16.msra.mxu0 0
    %1864 = vmatprep.subr.bf16.mxu0 0
    %1865 = vmatpush2.bf16.msra.mxu0 0
    %1866 = vmatprep.subr.bf16.mxu0 0
    %1867 = vmatpush2.bf16.msra.mxu0 0
    %1868 = vmatprep.mubr.bf16.mxu0 0
    %1869 = vmatmul.mubr.bf16.gmra.mxu0 %v499
    %v1870 = vpop.f32.mrf.mxu0
    %v1871 = vadd.f32 0.0, %v1870
    %v1872 = vpop.f32.mrf.mxu0
    %v1873 = vpop.f32.mrf.mxu0
    %v1874 = vadd.f32 0.0, %v1873
    %v1875 = vpop.f32.mrf.mxu0
    %1876 = vmatprep.mubr.bf16.mxu0 0
    %1877 = vmatmul.mubr.bf16.gmra.mxu0 %v502
    %v1878 = vpop.f32.mrf.mxu0
    %v1879 = vadd.f32 0.0, %v1878
    %v1880 = vpop.f32.mrf.mxu0
    %v1881 = vpop.f32.mrf.mxu0
    %v1882 = vadd.f32 0.0, %v1881
    %v1883 = vpop.f32.mrf.mxu0
    %1884 = vmatprep.mubr.bf16.mxu0 0
    %1885 = vmatmul.mubr.bf16.gmra.mxu0 %v505
    %v1886 = vpop.f32.mrf.mxu0
    %v1887 = vadd.f32 0.0, %v1886
    %v1888 = vpop.f32.mrf.mxu0
    %v1889 = vpop.f32.mrf.mxu0
    %v1890 = vadd.f32 0.0, %v1889
    %v1891 = vpop.f32.mrf.mxu0
    %1892 = vmatprep.mubr.bf16.mxu0 0
    %1893 = vmatmul.mubr.bf16.gmra.mxu0 %v508
    %v1894 = vpop.f32.mrf.mxu0
    %v1895 = vadd.f32 0.0, %v1894
    %v1896 = vpop.f32.mrf.mxu0
    %v1897 = vpop.f32.mrf.mxu0
    %v1898 = vadd.f32 0.0, %v1897
    %v1899 = vpop.f32.mrf.mxu0
    %1900 = vmatprep.mubr.bf16.mxu0 0
    %1901 = vmatmul.mubr.bf16.gmra.mxu0 %v511
    %v1902 = vpop.f32.mrf.mxu0
    %v1903 = vadd.f32 0.0, %v1902
    %v1904 = vpop.f32.mrf.mxu0
    %v1905 = vpop.f32.mrf.mxu0
    %v1906 = vadd.f32 0.0, %v1905
    %v1907 = vpop.f32.mrf.mxu0
    %1908 = vmatprep.mubr.bf16.mxu0 0
    %1909 = vmatmul.mubr.bf16.gmra.mxu0 %v514
    %v1910 = vpop.f32.mrf.mxu0
    %v1911 = vadd.f32 0.0, %v1910
    %v1912 = vpop.f32.mrf.mxu0
    %v1913 = vpop.f32.mrf.mxu0
    %v1914 = vadd.f32 0.0, %v1913
    %v1915 = vpop.f32.mrf.mxu0
    %1916 = vmatprep.mubr.bf16.mxu0 0
    %1917 = vmatmul.mubr.bf16.gmra.mxu0 %v517
    %v1918 = vpop.f32.mrf.mxu0
    %v1919 = vadd.f32 0.0, %v1918
    %v1920 = vpop.f32.mrf.mxu0
    %v1921 = vpop.f32.mrf.mxu0
    %v1922 = vadd.f32 0.0, %v1921
    %v1923 = vpop.f32.mrf.mxu0
    %1924 = vmatprep.mubr.bf16.mxu0 0
    %1925 = vmatmul.mubr.bf16.gmra.mxu0 %v520
    %v1926 = vpop.f32.mrf.mxu0
    %v1927 = vadd.f32 0.0, %v1926
    %v1928 = vpop.f32.mrf.mxu0
    %v1929 = vpop.f32.mrf.mxu0
    %v1930 = vadd.f32 0.0, %v1929
    %v1931 = vpop.f32.mrf.mxu0
    %1932 = vdwg.mxu0
    %v1933 = vsel %vm371, %v1871, -inf
    %v1934 = vsel %vm371, %v1874, -inf
    %v1935 = vsel %vm371, %v1879, -inf
    %v1936 = vsel %vm371, %v1882, -inf
    %v1937 = vsel %vm371, %v1887, -inf
    %v1938 = vmax.f32 %v1933, %v1937
    %v1939 = vsel %vm371, %v1890, -inf
    %v1940 = vmax.f32 %v1934, %v1939
    %v1941 = vsel %vm371, %v1895, -inf
    %v1942 = vmax.f32 %v1935, %v1941
    %v1943 = vsel %vm371, %v1898, -inf
    %v1944 = vmax.f32 %v1936, %v1943
    %v1945 = vsel %vm371, %v1903, -inf
    %v1946 = vmax.f32 %v1938, %v1945
    %v1947 = vsel %vm371, %v1906, -inf
    %v1948 = vmax.f32 %v1940, %v1947
    %v1949 = vsel %vm371, %v1911, -inf
    %v1950 = vmax.f32 %v1942, %v1949
    %v1951 = vsel %vm371, %v1914, -inf
    %v1952 = vmax.f32 %v1944, %v1951
    %v1953 = vsel %vm371, %v1919, -inf
    %v1954 = vmax.f32 %v1946, %v1953
    %v1955 = vsel %vm371, %v1922, -inf
    %v1956 = vmax.f32 %v1948, %v1955
    %v1957 = vsel %vm371, %v1927, -inf
    %v1958 = vmax.f32 %v1950, %v1957
    %v1959 = vsel %vm371, %v1930, -inf
    %v1960 = vmax.f32 %v1952, %v1959
    %v1961 = vmax.f32 %v1954, %v1956
    %v1962 = vmax.f32 %v1958, %v1960
    %v1963 = vmax.f32 %v1961, %v1962
    %v1964 = vrot.slane %v1963, 4
    %v1965 = vmax.f32 %v1963, %v1964
    %v1966 = vrot.slane %v1965, 2
    %v1967 = vmax.f32 %v1965, %v1966
    %v1968 = vrot.slane %v1967, 1
    %v1969 = vmax.f32 %v1967, %v1968
    %v1970 = vmax.f32 %v1833, %v1969
    %v1971 = vsub.f32 %v1833, %v1970
    %v1972 = vmul.f32 %v1971, 1.442695
    %v1973 = vpow.pop %v1972
    %v1974 = vsub.f32 %v1871, %v1970
    %v1975 = vsub.f32 %v1874, %v1970
    %v1976 = vsub.f32 %v1879, %v1970
    %v1977 = vsub.f32 %v1882, %v1970
    %v1978 = vsub.f32 %v1887, %v1970
    %v1979 = vsub.f32 %v1890, %v1970
    %v1980 = vsub.f32 %v1895, %v1970
    %v1981 = vsub.f32 %v1898, %v1970
    %v1982 = vsub.f32 %v1903, %v1970
    %v1983 = vsub.f32 %v1906, %v1970
    %v1984 = vsub.f32 %v1911, %v1970
    %v1985 = vsub.f32 %v1914, %v1970
    %v1986 = vsub.f32 %v1919, %v1970
    %v1987 = vsub.f32 %v1922, %v1970
    %v1988 = vsub.f32 %v1927, %v1970
    %v1989 = vsub.f32 %v1930, %v1970
    %v1990 = vmul.f32 %v1974, 1.442695
    %v1991 = vpow.pop %v1990
    %v1992 = vmul.f32 %v1975, 1.442695
    %v1993 = vpow.pop %v1992
    %v1994 = vmul.f32 %v1976, 1.442695
    %v1995 = vpow.pop %v1994
    %v1996 = vmul.f32 %v1977, 1.442695
    %v1997 = vpow.pop %v1996
    %v1998 = vmul.f32 %v1978, 1.442695
    %v1999 = vpow.pop %v1998
    %v2000 = vmul.f32 %v1979, 1.442695
    %v2001 = vpow.pop %v2000
    %v2002 = vmul.f32 %v1980, 1.442695
    %v2003 = vpow.pop %v2002
    %v2004 = vmul.f32 %v1981, 1.442695
    %v2005 = vpow.pop %v2004
    %v2006 = vmul.f32 %v1982, 1.442695
    %v2007 = vpow.pop %v2006
    %v2008 = vmul.f32 %v1983, 1.442695
    %v2009 = vpow.pop %v2008
    %v2010 = vmul.f32 %v1984, 1.442695
    %v2011 = vpow.pop %v2010
    %v2012 = vmul.f32 %v1985, 1.442695
    %v2013 = vpow.pop %v2012
    %v2014 = vmul.f32 %v1986, 1.442695
    %v2015 = vpow.pop %v2014
    %v2016 = vmul.f32 %v1987, 1.442695
    %v2017 = vpow.pop %v2016
    %v2018 = vmul.f32 %v1988, 1.442695
    %v2019 = vpow.pop %v2018
    %v2020 = vmul.f32 %v1989, 1.442695
    %v2021 = vpow.pop %v2020
    %v2022 = vsel %vm371, %v1991, 0.0
    %v2023 = vsel %vm371, %v1993, 0.0
    %v2024 = vadd.f32 %v2022, %v2023
    %v2025 = vsel %vm371, %v1995, 0.0
    %v2026 = vadd.f32 %v2024, %v2025
    %v2027 = vsel %vm371, %v1997, 0.0
    %v2028 = vadd.f32 %v2026, %v2027
    %v2029 = vsel %vm371, %v1999, 0.0
    %v2030 = vadd.f32 %v2028, %v2029
    %v2031 = vsel %vm371, %v2001, 0.0
    %v2032 = vadd.f32 %v2030, %v2031
    %v2033 = vsel %vm371, %v2003, 0.0
    %v2034 = vadd.f32 %v2032, %v2033
    %v2035 = vsel %vm371, %v2005, 0.0
    %v2036 = vadd.f32 %v2034, %v2035
    %v2037 = vsel %vm371, %v2007, 0.0
    %v2038 = vadd.f32 %v2036, %v2037
    %v2039 = vsel %vm371, %v2009, 0.0
    %v2040 = vadd.f32 %v2038, %v2039
    %v2041 = vsel %vm371, %v2011, 0.0
    %v2042 = vadd.f32 %v2040, %v2041
    %v2043 = vsel %vm371, %v2013, 0.0
    %v2044 = vadd.f32 %v2042, %v2043
    %v2045 = vsel %vm371, %v2015, 0.0
    %v2046 = vadd.f32 %v2044, %v2045
    %v2047 = vsel %vm371, %v2017, 0.0
    %v2048 = vadd.f32 %v2046, %v2047
    %v2049 = vsel %vm371, %v2019, 0.0
    %v2050 = vadd.f32 %v2048, %v2049
    %v2051 = vsel %vm371, %v2021, 0.0
    %v2052 = vadd.f32 %v2050, %v2051
    %v2053 = vrot.slane %v2052, 4
    %v2054 = vadd.f32 %v2052, %v2053
    %v2055 = vrot.slane %v2054, 2
    %v2056 = vadd.f32 %v2054, %v2055
    %v2057 = vrot.slane %v2056, 1
    %v2058 = vadd.f32 %v2056, %v2057
    %v2059 = vadd.f32 %v1973, %v2058
    %2060 = vmatprep.subr.bf16.mxu0 0
    %2061 = vmatpush1.bf16.msra.mxu0 0
    %2062 = vmatprep.subr.bf16.mxu0 0
    %2063 = vmatpush1.bf16.msra.mxu0 0
    %2064 = vmatprep.subr.bf16.mxu0 0
    %2065 = vmatpush1.bf16.msra.mxu0 0
    %2066 = vmatprep.subr.bf16.mxu0 0
    %2067 = vmatpush1.bf16.msra.mxu0 0
    %2068 = vmatprep.subr.bf16.mxu0 0
    %2069 = vmatpush1.bf16.msra.mxu0 0
    %2070 = vmatprep.subr.bf16.mxu0 0
    %2071 = vmatpush1.bf16.msra.mxu0 0
    %2072 = vmatprep.subr.bf16.mxu0 0
    %2073 = vmatpush1.bf16.msra.mxu0 %v1835
    %2074 = vmatprep.subr.bf16.mxu0 0
    %2075 = vmatpush1.bf16.msra.mxu0 %v1834
    %2076 = vmatprep.subr.bf16.mxu0 0
    %2077 = vmatpush2.bf16.msra.mxu0 0
    %2078 = vmatprep.subr.bf16.mxu0 0
    %2079 = vmatpush2.bf16.msra.mxu0 0
    %2080 = vmatprep.subr.bf16.mxu0 0
    %2081 = vmatpush2.bf16.msra.mxu0 0
    %2082 = vmatprep.subr.bf16.mxu0 0
    %2083 = vmatpush2.bf16.msra.mxu0 0
    %2084 = vmatprep.subr.bf16.mxu0 0
    %2085 = vmatpush2.bf16.msra.mxu0 0
    %2086 = vmatprep.subr.bf16.mxu0 0
    %2087 = vmatpush2.bf16.msra.mxu0 0
    %2088 = vmatprep.subr.bf16.mxu0 0
    %2089 = vmatpush2.bf16.msra.mxu0 0
    %2090 = vmatprep.subr.bf16.mxu0 0
    %2091 = vmatpush2.bf16.msra.mxu0 0
    %2092 = vmatprep.mubr.bf16.mxu0 0
    %2093 = vmatmul.mubr.bf16.gmra.mxu0 %v803
    %v2094 = vpop.f32.mrf.mxu0
    %v2095 = vadd.f32 0.0, %v2094
    %v2096 = vpop.f32.mrf.mxu0
    %v2097 = vpop.f32.mrf.mxu0
    %v2098 = vadd.f32 0.0, %v2097
    %v2099 = vpop.f32.mrf.mxu0
    %2100 = vmatprep.mubr.bf16.mxu0 0
    %2101 = vmatmul.mubr.bf16.gmra.mxu0 %v806
    %v2102 = vpop.f32.mrf.mxu0
    %v2103 = vadd.f32 0.0, %v2102
    %v2104 = vpop.f32.mrf.mxu0
    %v2105 = vpop.f32.mrf.mxu0
    %v2106 = vadd.f32 0.0, %v2105
    %v2107 = vpop.f32.mrf.mxu0
    %2108 = vmatprep.mubr.bf16.mxu0 0
    %2109 = vmatmul.mubr.bf16.gmra.mxu0 %v809
    %v2110 = vpop.f32.mrf.mxu0
    %v2111 = vadd.f32 0.0, %v2110
    %v2112 = vpop.f32.mrf.mxu0
    %v2113 = vpop.f32.mrf.mxu0
    %v2114 = vadd.f32 0.0, %v2113
    %v2115 = vpop.f32.mrf.mxu0
    %2116 = vmatprep.mubr.bf16.mxu0 0
    %2117 = vmatmul.mubr.bf16.gmra.mxu0 %v812
    %v2118 = vpop.f32.mrf.mxu0
    %v2119 = vadd.f32 0.0, %v2118
    %v2120 = vpop.f32.mrf.mxu0
    %v2121 = vpop.f32.mrf.mxu0
    %v2122 = vadd.f32 0.0, %v2121
    %v2123 = vpop.f32.mrf.mxu0
    %2124 = vmatprep.mubr.bf16.mxu0 0
    %2125 = vmatmul.mubr.bf16.gmra.mxu0 %v815
    %v2126 = vpop.f32.mrf.mxu0
    %v2127 = vadd.f32 0.0, %v2126
    %v2128 = vpop.f32.mrf.mxu0
    %v2129 = vpop.f32.mrf.mxu0
    %v2130 = vadd.f32 0.0, %v2129
    %v2131 = vpop.f32.mrf.mxu0
    %2132 = vmatprep.mubr.bf16.mxu0 0
    %2133 = vmatmul.mubr.bf16.gmra.mxu0 %v818
    %v2134 = vpop.f32.mrf.mxu0
    %v2135 = vadd.f32 0.0, %v2134
    %v2136 = vpop.f32.mrf.mxu0
    %v2137 = vpop.f32.mrf.mxu0
    %v2138 = vadd.f32 0.0, %v2137
    %v2139 = vpop.f32.mrf.mxu0
    %2140 = vmatprep.mubr.bf16.mxu0 0
    %2141 = vmatmul.mubr.bf16.gmra.mxu0 %v821
    %v2142 = vpop.f32.mrf.mxu0
    %v2143 = vadd.f32 0.0, %v2142
    %v2144 = vpop.f32.mrf.mxu0
    %v2145 = vpop.f32.mrf.mxu0
    %v2146 = vadd.f32 0.0, %v2145
    %v2147 = vpop.f32.mrf.mxu0
    %2148 = vmatprep.mubr.bf16.mxu0 0
    %2149 = vmatmul.mubr.bf16.gmra.mxu0 %v824
    %v2150 = vpop.f32.mrf.mxu0
    %v2151 = vadd.f32 0.0, %v2150
    %v2152 = vpop.f32.mrf.mxu0
    %v2153 = vpop.f32.mrf.mxu0
    %v2154 = vadd.f32 0.0, %v2153
    %v2155 = vpop.f32.mrf.mxu0
    %2156 = vdwg.mxu0
    %v2157 = vsel %vm371, %v2095, -inf
    %v2158 = vsel %vm371, %v2098, -inf
    %v2159 = vsel %vm371, %v2103, -inf
    %v2160 = vsel %vm371, %v2106, -inf
    %v2161 = vsel %vm371, %v2111, -inf
    %v2162 = vmax.f32 %v2157, %v2161
    %v2163 = vsel %vm371, %v2114, -inf
    %v2164 = vmax.f32 %v2158, %v2163
    %v2165 = vsel %vm371, %v2119, -inf
    %v2166 = vmax.f32 %v2159, %v2165
    %v2167 = vsel %vm371, %v2122, -inf
    %v2168 = vmax.f32 %v2160, %v2167
    %v2169 = vsel %vm371, %v2127, -inf
    %v2170 = vmax.f32 %v2162, %v2169
    %v2171 = vsel %vm371, %v2130, -inf
    %v2172 = vmax.f32 %v2164, %v2171
    %v2173 = vsel %vm371, %v2135, -inf
    %v2174 = vmax.f32 %v2166, %v2173
    %v2175 = vsel %vm371, %v2138, -inf
    %v2176 = vmax.f32 %v2168, %v2175
    %v2177 = vsel %vm371, %v2143, -inf
    %v2178 = vmax.f32 %v2170, %v2177
    %v2179 = vsel %vm371, %v2146, -inf
    %v2180 = vmax.f32 %v2172, %v2179
    %v2181 = vsel %vm371, %v2151, -inf
    %v2182 = vmax.f32 %v2174, %v2181
    %v2183 = vsel %vm371, %v2154, -inf
    %v2184 = vmax.f32 %v2176, %v2183
    %v2185 = vmax.f32 %v2178, %v2180
    %v2186 = vmax.f32 %v2182, %v2184
    %v2187 = vmax.f32 %v2185, %v2186
    %v2188 = vrot.slane %v2187, 4
    %v2189 = vmax.f32 %v2187, %v2188
    %v2190 = vrot.slane %v2189, 2
    %v2191 = vmax.f32 %v2189, %v2190
    %v2192 = vrot.slane %v2191, 1
    %v2193 = vmax.f32 %v2191, %v2192
    %v2194 = vmax.f32 %v1970, %v2193
    %v2195 = vsub.f32 %v1970, %v2194
    %v2196 = vmul.f32 %v2195, 1.442695
    %v2197 = vpow.pop %v2196
    %v2198 = vmul.f32 %v2059, %v2197
    %v2199 = vsub.f32 %v2095, %v2194
    %v2200 = vsub.f32 %v2098, %v2194
    %v2201 = vsub.f32 %v2103, %v2194
    %v2202 = vsub.f32 %v2106, %v2194
    %v2203 = vsub.f32 %v2111, %v2194
    %v2204 = vsub.f32 %v2114, %v2194
    %v2205 = vsub.f32 %v2119, %v2194
    %v2206 = vsub.f32 %v2122, %v2194
    %v2207 = vsub.f32 %v2127, %v2194
    %v2208 = vsub.f32 %v2130, %v2194
    %v2209 = vsub.f32 %v2135, %v2194
    %v2210 = vsub.f32 %v2138, %v2194
    %v2211 = vsub.f32 %v2143, %v2194
    %v2212 = vsub.f32 %v2146, %v2194
    %v2213 = vsub.f32 %v2151, %v2194
    %v2214 = vsub.f32 %v2154, %v2194
    %v2215 = vmul.f32 %v2199, 1.442695
    %v2216 = vpow.pop %v2215
    %v2217 = vmul.f32 %v2200, 1.442695
    %v2218 = vpow.pop %v2217
    %v2219 = vmul.f32 %v2201, 1.442695
    %v2220 = vpow.pop %v2219
    %v2221 = vmul.f32 %v2202, 1.442695
    %v2222 = vpow.pop %v2221
    %v2223 = vmul.f32 %v2203, 1.442695
    %v2224 = vpow.pop %v2223
    %v2225 = vmul.f32 %v2204, 1.442695
    %v2226 = vpow.pop %v2225
    %v2227 = vmul.f32 %v2205, 1.442695
    %v2228 = vpow.pop %v2227
    %v2229 = vmul.f32 %v2206, 1.442695
    %v2230 = vpow.pop %v2229
    %v2231 = vmul.f32 %v2207, 1.442695
    %v2232 = vpow.pop %v2231
    %v2233 = vmul.f32 %v2208, 1.442695
    %v2234 = vpow.pop %v2233
    %v2235 = vmul.f32 %v2209, 1.442695
    %v2236 = vpow.pop %v2235
    %v2237 = vmul.f32 %v2210, 1.442695
    %v2238 = vpow.pop %v2237
    %v2239 = vmul.f32 %v2211, 1.442695
    %v2240 = vpow.pop %v2239
    %v2241 = vmul.f32 %v2212, 1.442695
    %v2242 = vpow.pop %v2241
    %v2243 = vmul.f32 %v2213, 1.442695
    %v2244 = vpow.pop %v2243
    %v2245 = vmul.f32 %v2214, 1.442695
    %v2246 = vpow.pop %v2245
    %v2247 = vsel %vm371, %v2216, 0.0
    %v2248 = vsel %vm371, %v2218, 0.0
    %v2249 = vadd.f32 %v2247, %v2248
    %v2250 = vsel %vm371, %v2220, 0.0
    %v2251 = vadd.f32 %v2249, %v2250
    %v2252 = vsel %vm371, %v2222, 0.0
    %v2253 = vadd.f32 %v2251, %v2252
    %v2254 = vsel %vm371, %v2224, 0.0
    %v2255 = vadd.f32 %v2253, %v2254
    %v2256 = vsel %vm371, %v2226, 0.0
    %v2257 = vadd.f32 %v2255, %v2256
    %v2258 = vsel %vm371, %v2228, 0.0
    %v2259 = vadd.f32 %v2257, %v2258
    %v2260 = vsel %vm371, %v2230, 0.0
    %v2261 = vadd.f32 %v2259, %v2260
    %v2262 = vsel %vm371, %v2232, 0.0
    %v2263 = vadd.f32 %v2261, %v2262
    %v2264 = vsel %vm371, %v2234, 0.0
    %v2265 = vadd.f32 %v2263, %v2264
    %v2266 = vsel %vm371, %v2236, 0.0
    %v2267 = vadd.f32 %v2265, %v2266
    %v2268 = vsel %vm371, %v2238, 0.0
    %v2269 = vadd.f32 %v2267, %v2268
    %v2270 = vsel %vm371, %v2240, 0.0
    %v2271 = vadd.f32 %v2269, %v2270
    %v2272 = vsel %vm371, %v2242, 0.0
    %v2273 = vadd.f32 %v2271, %v2272
    %v2274 = vsel %vm371, %v2244, 0.0
    %v2275 = vadd.f32 %v2273, %v2274
    %v2276 = vsel %vm371, %v2246, 0.0
    %v2277 = vadd.f32 %v2275, %v2276
    %v2278 = vrot.slane %v2277, 4
    %v2279 = vadd.f32 %v2277, %v2278
    %v2280 = vrot.slane %v2279, 2
    %v2281 = vadd.f32 %v2279, %v2280
    %v2282 = vrot.slane %v2281, 1
    %v2283 = vadd.f32 %v2281, %v2282
    %v2284 = vadd.f32 %v2198, %v2283
    %2285 = vmatprep.subr.bf16.mxu0 0
    %2286 = vmatpush1.bf16.msra.mxu0 0
    %2287 = vmatprep.subr.bf16.mxu0 0
    %2288 = vmatpush1.bf16.msra.mxu0 0
    %2289 = vmatprep.subr.bf16.mxu0 0
    %2290 = vmatpush1.bf16.msra.mxu0 0
    %2291 = vmatprep.subr.bf16.mxu0 0
    %2292 = vmatpush1.bf16.msra.mxu0 0
    %2293 = vmatprep.subr.bf16.mxu0 0
    %2294 = vmatpush1.bf16.msra.mxu0 0
    %2295 = vmatprep.subr.bf16.mxu0 0
    %2296 = vmatpush1.bf16.msra.mxu0 0
    %2297 = vmatprep.subr.bf16.mxu0 0
    %2298 = vmatpush1.bf16.msra.mxu0 %v1835
    %2299 = vmatprep.subr.bf16.mxu0 0
    %2300 = vmatpush1.bf16.msra.mxu0 %v1834
    %2301 = vmatprep.subr.bf16.mxu0 0
    %2302 = vmatpush2.bf16.msra.mxu0 0
    %2303 = vmatprep.subr.bf16.mxu0 0
    %2304 = vmatpush2.bf16.msra.mxu0 0
    %2305 = vmatprep.subr.bf16.mxu0 0
    %2306 = vmatpush2.bf16.msra.mxu0 0
    %2307 = vmatprep.subr.bf16.mxu0 0
    %2308 = vmatpush2.bf16.msra.mxu0 0
    %2309 = vmatprep.subr.bf16.mxu0 0
    %2310 = vmatpush2.bf16.msra.mxu0 0
    %2311 = vmatprep.subr.bf16.mxu0 0
    %2312 = vmatpush2.bf16.msra.mxu0 0
    %2313 = vmatprep.subr.bf16.mxu0 0
    %2314 = vmatpush2.bf16.msra.mxu0 0
    %2315 = vmatprep.subr.bf16.mxu0 0
    %2316 = vmatpush2.bf16.msra.mxu0 0
    %2317 = vmatprep.mubr.bf16.mxu0 0
    %2318 = vmatmul.mubr.bf16.gmra.mxu0 %v1108
    %v2319 = vpop.f32.mrf.mxu0
    %v2320 = vadd.f32 0.0, %v2319
    %v2321 = vpop.f32.mrf.mxu0
    %v2322 = vpop.f32.mrf.mxu0
    %v2323 = vadd.f32 0.0, %v2322
    %v2324 = vpop.f32.mrf.mxu0
    %2325 = vmatprep.mubr.bf16.mxu0 0
    %2326 = vmatmul.mubr.bf16.gmra.mxu0 %v1111
    %v2327 = vpop.f32.mrf.mxu0
    %v2328 = vadd.f32 0.0, %v2327
    %v2329 = vpop.f32.mrf.mxu0
    %v2330 = vpop.f32.mrf.mxu0
    %v2331 = vadd.f32 0.0, %v2330
    %v2332 = vpop.f32.mrf.mxu0
    %2333 = vmatprep.mubr.bf16.mxu0 0
    %2334 = vmatmul.mubr.bf16.gmra.mxu0 %v1114
    %v2335 = vpop.f32.mrf.mxu0
    %v2336 = vadd.f32 0.0, %v2335
    %v2337 = vpop.f32.mrf.mxu0
    %v2338 = vpop.f32.mrf.mxu0
    %v2339 = vadd.f32 0.0, %v2338
    %v2340 = vpop.f32.mrf.mxu0
    %2341 = vmatprep.mubr.bf16.mxu0 0
    %2342 = vmatmul.mubr.bf16.gmra.mxu0 %v1117
    %v2343 = vpop.f32.mrf.mxu0
    %v2344 = vadd.f32 0.0, %v2343
    %v2345 = vpop.f32.mrf.mxu0
    %v2346 = vpop.f32.mrf.mxu0
    %v2347 = vadd.f32 0.0, %v2346
    %v2348 = vpop.f32.mrf.mxu0
    %2349 = vmatprep.mubr.bf16.mxu0 0
    %2350 = vmatmul.mubr.bf16.gmra.mxu0 %v1120
    %v2351 = vpop.f32.mrf.mxu0
    %v2352 = vadd.f32 0.0, %v2351
    %v2353 = vpop.f32.mrf.mxu0
    %v2354 = vpop.f32.mrf.mxu0
    %v2355 = vadd.f32 0.0, %v2354
    %v2356 = vpop.f32.mrf.mxu0
    %2357 = vmatprep.mubr.bf16.mxu0 0
    %2358 = vmatmul.mubr.bf16.gmra.mxu0 %v1123
    %v2359 = vpop.f32.mrf.mxu0
    %v2360 = vadd.f32 0.0, %v2359
    %v2361 = vpop.f32.mrf.mxu0
    %v2362 = vpop.f32.mrf.mxu0
    %v2363 = vadd.f32 0.0, %v2362
    %v2364 = vpop.f32.mrf.mxu0
    %2365 = vmatprep.mubr.bf16.mxu0 0
    %2366 = vmatmul.mubr.bf16.gmra.mxu0 %v1126
    %v2367 = vpop.f32.mrf.mxu0
    %v2368 = vadd.f32 0.0, %v2367
    %v2369 = vpop.f32.mrf.mxu0
    %v2370 = vpop.f32.mrf.mxu0
    %v2371 = vadd.f32 0.0, %v2370
    %v2372 = vpop.f32.mrf.mxu0
    %2373 = vmatprep.mubr.bf16.mxu0 0
    %2374 = vmatmul.mubr.bf16.gmra.mxu0 %v1129
    %v2375 = vpop.f32.mrf.mxu0
    %v2376 = vadd.f32 0.0, %v2375
    %v2377 = vpop.f32.mrf.mxu0
    %v2378 = vpop.f32.mrf.mxu0
    %v2379 = vadd.f32 0.0, %v2378
    %v2380 = vpop.f32.mrf.mxu0
    %2381 = vdwg.mxu0
    %v2382 = vsel %vm371, %v2320, -inf
    %v2383 = vsel %vm371, %v2323, -inf
    %v2384 = vsel %vm371, %v2328, -inf
    %v2385 = vsel %vm371, %v2331, -inf
    %v2386 = vsel %vm371, %v2336, -inf
    %v2387 = vmax.f32 %v2382, %v2386
    %v2388 = vsel %vm371, %v2339, -inf
    %v2389 = vmax.f32 %v2383, %v2388
    %v2390 = vsel %vm371, %v2344, -inf
    %v2391 = vmax.f32 %v2384, %v2390
    %v2392 = vsel %vm371, %v2347, -inf
    %v2393 = vmax.f32 %v2385, %v2392
    %v2394 = vsel %vm371, %v2352, -inf
    %v2395 = vmax.f32 %v2387, %v2394
    %v2396 = vsel %vm371, %v2355, -inf
    %v2397 = vmax.f32 %v2389, %v2396
    %v2398 = vsel %vm371, %v2360, -inf
    %v2399 = vmax.f32 %v2391, %v2398
    %v2400 = vsel %vm371, %v2363, -inf
    %v2401 = vmax.f32 %v2393, %v2400
    %v2402 = vsel %vm371, %v2368, -inf
    %v2403 = vmax.f32 %v2395, %v2402
    %v2404 = vsel %vm371, %v2371, -inf
    %v2405 = vmax.f32 %v2397, %v2404
    %v2406 = vsel %vm371, %v2376, -inf
    %v2407 = vmax.f32 %v2399, %v2406
    %v2408 = vsel %vm371, %v2379, -inf
    %v2409 = vmax.f32 %v2401, %v2408
    %v2410 = vmax.f32 %v2403, %v2405
    %v2411 = vmax.f32 %v2407, %v2409
    %v2412 = vmax.f32 %v2410, %v2411
    %v2413 = vrot.slane %v2412, 4
    %v2414 = vmax.f32 %v2412, %v2413
    %v2415 = vrot.slane %v2414, 2
    %v2416 = vmax.f32 %v2414, %v2415
    %v2417 = vrot.slane %v2416, 1
    %v2418 = vmax.f32 %v2416, %v2417
    %v2419 = vmax.f32 %v2194, %v2418
    %v2420 = vsub.f32 %v2194, %v2419
    %v2421 = vmul.f32 %v2420, 1.442695
    %v2422 = vpow.pop %v2421
    %v2423 = vmul.f32 %v2284, %v2422
    %v2424 = vsub.f32 %v2320, %v2419
    %v2425 = vsub.f32 %v2323, %v2419
    %v2426 = vsub.f32 %v2328, %v2419
    %v2427 = vsub.f32 %v2331, %v2419
    %v2428 = vsub.f32 %v2336, %v2419
    %v2429 = vsub.f32 %v2339, %v2419
    %v2430 = vsub.f32 %v2344, %v2419
    %v2431 = vsub.f32 %v2347, %v2419
    %v2432 = vsub.f32 %v2352, %v2419
    %v2433 = vsub.f32 %v2355, %v2419
    %v2434 = vsub.f32 %v2360, %v2419
    %v2435 = vsub.f32 %v2363, %v2419
    %v2436 = vsub.f32 %v2368, %v2419
    %v2437 = vsub.f32 %v2371, %v2419
    %v2438 = vsub.f32 %v2376, %v2419
    %v2439 = vsub.f32 %v2379, %v2419
    %v2440 = vmul.f32 %v2424, 1.442695
    %v2441 = vpow.pop %v2440
    %v2442 = vmul.f32 %v2425, 1.442695
    %v2443 = vpow.pop %v2442
    %v2444 = vmul.f32 %v2426, 1.442695
    %v2445 = vpow.pop %v2444
    %v2446 = vmul.f32 %v2427, 1.442695
    %v2447 = vpow.pop %v2446
    %v2448 = vmul.f32 %v2428, 1.442695
    %v2449 = vpow.pop %v2448
    %v2450 = vmul.f32 %v2429, 1.442695
    %v2451 = vpow.pop %v2450
    %v2452 = vmul.f32 %v2430, 1.442695
    %v2453 = vpow.pop %v2452
    %v2454 = vmul.f32 %v2431, 1.442695
    %v2455 = vpow.pop %v2454
    %v2456 = vmul.f32 %v2432, 1.442695
    %v2457 = vpow.pop %v2456
    %v2458 = vmul.f32 %v2433, 1.442695
    %v2459 = vpow.pop %v2458
    %v2460 = vmul.f32 %v2434, 1.442695
    %v2461 = vpow.pop %v2460
    %v2462 = vmul.f32 %v2435, 1.442695
    %v2463 = vpow.pop %v2462
    %v2464 = vmul.f32 %v2436, 1.442695
    %v2465 = vpow.pop %v2464
    %v2466 = vmul.f32 %v2437, 1.442695
    %v2467 = vpow.pop %v2466
    %v2468 = vmul.f32 %v2438, 1.442695
    %v2469 = vpow.pop %v2468
    %v2470 = vmul.f32 %v2439, 1.442695
    %v2471 = vpow.pop %v2470
    %v2472 = vsel %vm371, %v2441, 0.0
    %v2473 = vsel %vm371, %v2443, 0.0
    %v2474 = vadd.f32 %v2472, %v2473
    %v2475 = vsel %vm371, %v2445, 0.0
    %v2476 = vadd.f32 %v2474, %v2475
    %v2477 = vsel %vm371, %v2447, 0.0
    %v2478 = vadd.f32 %v2476, %v2477
    %v2479 = vsel %vm371, %v2449, 0.0
    %v2480 = vadd.f32 %v2478, %v2479
    %v2481 = vsel %vm371, %v2451, 0.0
    %v2482 = vadd.f32 %v2480, %v2481
    %v2483 = vsel %vm371, %v2453, 0.0
    %v2484 = vadd.f32 %v2482, %v2483
    %v2485 = vsel %vm371, %v2455, 0.0
    %v2486 = vadd.f32 %v2484, %v2485
    %v2487 = vsel %vm371, %v2457, 0.0
    %v2488 = vadd.f32 %v2486, %v2487
    %v2489 = vsel %vm371, %v2459, 0.0
    %v2490 = vadd.f32 %v2488, %v2489
    %v2491 = vsel %vm371, %v2461, 0.0
    %v2492 = vadd.f32 %v2490, %v2491
    %v2493 = vsel %vm371, %v2463, 0.0
    %v2494 = vadd.f32 %v2492, %v2493
    %v2495 = vsel %vm371, %v2465, 0.0
    %v2496 = vadd.f32 %v2494, %v2495
    %v2497 = vsel %vm371, %v2467, 0.0
    %v2498 = vadd.f32 %v2496, %v2497
    %v2499 = vsel %vm371, %v2469, 0.0
    %v2500 = vadd.f32 %v2498, %v2499
    %v2501 = vsel %vm371, %v2471, 0.0
    %v2502 = vadd.f32 %v2500, %v2501
    %v2503 = vrot.slane %v2502, 4
    %v2504 = vadd.f32 %v2502, %v2503
    %v2505 = vrot.slane %v2504, 2
    %v2506 = vadd.f32 %v2504, %v2505
    %v2507 = vrot.slane %v2506, 1
    %v2508 = vadd.f32 %v2506, %v2507
    %v2509 = vadd.f32 %v2423, %v2508
    %2510 = vmatprep.subr.bf16.mxu0 0
    %2511 = vmatpush1.bf16.msra.mxu0 0
    %2512 = vmatprep.subr.bf16.mxu0 0
    %2513 = vmatpush1.bf16.msra.mxu0 0
    %2514 = vmatprep.subr.bf16.mxu0 0
    %2515 = vmatpush1.bf16.msra.mxu0 0
    %2516 = vmatprep.subr.bf16.mxu0 0
    %2517 = vmatpush1.bf16.msra.mxu0 0
    %2518 = vmatprep.subr.bf16.mxu0 0
    %2519 = vmatpush1.bf16.msra.mxu0 0
    %2520 = vmatprep.subr.bf16.mxu0 0
    %2521 = vmatpush1.bf16.msra.mxu0 0
    %2522 = vmatprep.subr.bf16.mxu0 0
    %2523 = vmatpush1.bf16.msra.mxu0 %v1835
    %2524 = vmatprep.subr.bf16.mxu0 0
    %2525 = vmatpush1.bf16.msra.mxu0 %v1834
    %2526 = vmatprep.subr.bf16.mxu0 0
    %2527 = vmatpush2.bf16.msra.mxu0 0
    %2528 = vmatprep.subr.bf16.mxu0 0
    %2529 = vmatpush2.bf16.msra.mxu0 0
    %2530 = vmatprep.subr.bf16.mxu0 0
    %2531 = vmatpush2.bf16.msra.mxu0 0
    %2532 = vmatprep.subr.bf16.mxu0 0
    %2533 = vmatpush2.bf16.msra.mxu0 0
    %2534 = vmatprep.subr.bf16.mxu0 0
    %2535 = vmatpush2.bf16.msra.mxu0 0
    %2536 = vmatprep.subr.bf16.mxu0 0
    %2537 = vmatpush2.bf16.msra.mxu0 0
    %2538 = vmatprep.subr.bf16.mxu0 0
    %2539 = vmatpush2.bf16.msra.mxu0 0
    %2540 = vmatprep.subr.bf16.mxu0 0
    %2541 = vmatpush2.bf16.msra.mxu0 0
    %2542 = vmatprep.mubr.bf16.mxu0 0
    %2543 = vmatmul.mubr.bf16.gmra.mxu0 %v1413
    %v2544 = vpop.f32.mrf.mxu0
    %v2545 = vadd.f32 0.0, %v2544
    %v2546 = vpop.f32.mrf.mxu0
    %v2547 = vpop.f32.mrf.mxu0
    %v2548 = vadd.f32 0.0, %v2547
    %v2549 = vpop.f32.mrf.mxu0
    %2550 = vmatprep.mubr.bf16.mxu0 0
    %2551 = vmatmul.mubr.bf16.gmra.mxu0 %v1416
    %v2552 = vpop.f32.mrf.mxu0
    %v2553 = vadd.f32 0.0, %v2552
    %v2554 = vpop.f32.mrf.mxu0
    %v2555 = vpop.f32.mrf.mxu0
    %v2556 = vadd.f32 0.0, %v2555
    %v2557 = vpop.f32.mrf.mxu0
    %2558 = vmatprep.mubr.bf16.mxu0 0
    %2559 = vmatmul.mubr.bf16.gmra.mxu0 %v1419
    %v2560 = vpop.f32.mrf.mxu0
    %v2561 = vadd.f32 0.0, %v2560
    %v2562 = vpop.f32.mrf.mxu0
    %v2563 = vpop.f32.mrf.mxu0
    %v2564 = vadd.f32 0.0, %v2563
    %v2565 = vpop.f32.mrf.mxu0
    %2566 = vmatprep.mubr.bf16.mxu0 0
    %2567 = vmatmul.mubr.bf16.gmra.mxu0 %v1422
    %v2568 = vpop.f32.mrf.mxu0
    %v2569 = vadd.f32 0.0, %v2568
    %v2570 = vpop.f32.mrf.mxu0
    %v2571 = vpop.f32.mrf.mxu0
    %v2572 = vadd.f32 0.0, %v2571
    %v2573 = vpop.f32.mrf.mxu0
    %2574 = vmatprep.mubr.bf16.mxu0 0
    %2575 = vmatmul.mubr.bf16.gmra.mxu0 %v1425
    %v2576 = vpop.f32.mrf.mxu0
    %v2577 = vadd.f32 0.0, %v2576
    %v2578 = vpop.f32.mrf.mxu0
    %v2579 = vpop.f32.mrf.mxu0
    %v2580 = vadd.f32 0.0, %v2579
    %v2581 = vpop.f32.mrf.mxu0
    %2582 = vmatprep.mubr.bf16.mxu0 0
    %2583 = vmatmul.mubr.bf16.gmra.mxu0 %v1428
    %v2584 = vpop.f32.mrf.mxu0
    %v2585 = vadd.f32 0.0, %v2584
    %v2586 = vpop.f32.mrf.mxu0
    %v2587 = vpop.f32.mrf.mxu0
    %v2588 = vadd.f32 0.0, %v2587
    %v2589 = vpop.f32.mrf.mxu0
    %2590 = vmatprep.mubr.bf16.mxu0 0
    %2591 = vmatmul.mubr.bf16.gmra.mxu0 %v1431
    %v2592 = vpop.f32.mrf.mxu0
    %v2593 = vadd.f32 0.0, %v2592
    %v2594 = vpop.f32.mrf.mxu0
    %v2595 = vpop.f32.mrf.mxu0
    %v2596 = vadd.f32 0.0, %v2595
    %v2597 = vpop.f32.mrf.mxu0
    %2598 = vmatprep.mubr.bf16.mxu0 0
    %2599 = vmatmul.mubr.bf16.gmra.mxu0 %v1434
    %v2600 = vpop.f32.mrf.mxu0
    %v2601 = vadd.f32 0.0, %v2600
    %v2602 = vpop.f32.mrf.mxu0
    %v2603 = vpop.f32.mrf.mxu0
    %v2604 = vadd.f32 0.0, %v2603
    %v2605 = vpop.f32.mrf.mxu0
    %2606 = vdwg.mxu0
    %v2607 = vsel %vm371, %v2545, -inf
    %v2608 = vsel %vm371, %v2548, -inf
    %v2609 = vsel %vm371, %v2553, -inf
    %v2610 = vsel %vm371, %v2556, -inf
    %v2611 = vsel %vm371, %v2561, -inf
    %v2612 = vmax.f32 %v2607, %v2611
    %v2613 = vsel %vm371, %v2564, -inf
    %v2614 = vmax.f32 %v2608, %v2613
    %v2615 = vsel %vm371, %v2569, -inf
    %v2616 = vmax.f32 %v2609, %v2615
    %v2617 = vsel %vm371, %v2572, -inf
    %v2618 = vmax.f32 %v2610, %v2617
    %v2619 = vsel %vm371, %v2577, -inf
    %v2620 = vmax.f32 %v2612, %v2619
    %v2621 = vsel %vm371, %v2580, -inf
    %v2622 = vmax.f32 %v2614, %v2621
    %v2623 = vsel %vm371, %v2585, -inf
    %v2624 = vmax.f32 %v2616, %v2623
    %v2625 = vsel %vm371, %v2588, -inf
    %v2626 = vmax.f32 %v2618, %v2625
    %v2627 = vsel %vm371, %v2593, -inf
    %v2628 = vmax.f32 %v2620, %v2627
    %v2629 = vsel %vm371, %v2596, -inf
    %v2630 = vmax.f32 %v2622, %v2629
    %v2631 = vsel %vm371, %v2601, -inf
    %v2632 = vmax.f32 %v2624, %v2631
    %v2633 = vsel %vm371, %v2604, -inf
    %v2634 = vmax.f32 %v2626, %v2633
    %v2635 = vmax.f32 %v2628, %v2630
    %v2636 = vmax.f32 %v2632, %v2634
    %v2637 = vmax.f32 %v2635, %v2636
    %v2638 = vrot.slane %v2637, 4
    %v2639 = vmax.f32 %v2637, %v2638
    %v2640 = vrot.slane %v2639, 2
    %v2641 = vmax.f32 %v2639, %v2640
    %v2642 = vrot.slane %v2641, 1
    %v2643 = vmax.f32 %v2641, %v2642
    %v2644 = vmax.f32 %v2419, %v2643
    %v2645 = vsub.f32 %v2419, %v2644
    %v2646 = vmul.f32 %v2645, 1.442695
    %v2647 = vpow.pop %v2646
    %v2648 = vmul.f32 %v2509, %v2647
    %v2649 = vsub.f32 %v2545, %v2644
    %v2650 = vsub.f32 %v2548, %v2644
    %v2651 = vsub.f32 %v2553, %v2644
    %v2652 = vsub.f32 %v2556, %v2644
    %v2653 = vsub.f32 %v2561, %v2644
    %v2654 = vsub.f32 %v2564, %v2644
    %v2655 = vsub.f32 %v2569, %v2644
    %v2656 = vsub.f32 %v2572, %v2644
    %v2657 = vsub.f32 %v2577, %v2644
    %v2658 = vsub.f32 %v2580, %v2644
    %v2659 = vsub.f32 %v2585, %v2644
    %v2660 = vsub.f32 %v2588, %v2644
    %v2661 = vsub.f32 %v2593, %v2644
    %v2662 = vsub.f32 %v2596, %v2644
    %v2663 = vsub.f32 %v2601, %v2644
    %v2664 = vsub.f32 %v2604, %v2644
    %v2665 = vmul.f32 %v2649, 1.442695
    %v2666 = vpow.pop %v2665
    %v2667 = vmul.f32 %v2650, 1.442695
    %v2668 = vpow.pop %v2667
    %v2669 = vmul.f32 %v2651, 1.442695
    %v2670 = vpow.pop %v2669
    %v2671 = vmul.f32 %v2652, 1.442695
    %v2672 = vpow.pop %v2671
    %v2673 = vmul.f32 %v2653, 1.442695
    %v2674 = vpow.pop %v2673
    %v2675 = vmul.f32 %v2654, 1.442695
    %v2676 = vpow.pop %v2675
    %v2677 = vmul.f32 %v2655, 1.442695
    %v2678 = vpow.pop %v2677
    %v2679 = vmul.f32 %v2656, 1.442695
    %v2680 = vpow.pop %v2679
    %v2681 = vmul.f32 %v2657, 1.442695
    %v2682 = vpow.pop %v2681
    %v2683 = vmul.f32 %v2658, 1.442695
    %v2684 = vpow.pop %v2683
    %v2685 = vmul.f32 %v2659, 1.442695
    %v2686 = vpow.pop %v2685
    %v2687 = vmul.f32 %v2660, 1.442695
    %v2688 = vpow.pop %v2687
    %v2689 = vmul.f32 %v2661, 1.442695
    %v2690 = vpow.pop %v2689
    %v2691 = vmul.f32 %v2662, 1.442695
    %v2692 = vpow.pop %v2691
    %v2693 = vmul.f32 %v2663, 1.442695
    %v2694 = vpow.pop %v2693
    %v2695 = vmul.f32 %v2664, 1.442695
    %v2696 = vpow.pop %v2695
    %v2697 = vsel %vm371, %v2666, 0.0
    %v2698 = vsel %vm371, %v2668, 0.0
    %v2699 = vadd.f32 %v2697, %v2698
    %v2700 = vsel %vm371, %v2670, 0.0
    %v2701 = vadd.f32 %v2699, %v2700
    %v2702 = vsel %vm371, %v2672, 0.0
    %v2703 = vadd.f32 %v2701, %v2702
    %v2704 = vsel %vm371, %v2674, 0.0
    %v2705 = vadd.f32 %v2703, %v2704
    %v2706 = vsel %vm371, %v2676, 0.0
    %v2707 = vadd.f32 %v2705, %v2706
    %v2708 = vsel %vm371, %v2678, 0.0
    %v2709 = vadd.f32 %v2707, %v2708
    %v2710 = vsel %vm371, %v2680, 0.0
    %v2711 = vadd.f32 %v2709, %v2710
    %v2712 = vsel %vm371, %v2682, 0.0
    %v2713 = vadd.f32 %v2711, %v2712
    %v2714 = vsel %vm371, %v2684, 0.0
    %v2715 = vadd.f32 %v2713, %v2714
    %v2716 = vsel %vm371, %v2686, 0.0
    %v2717 = vadd.f32 %v2715, %v2716
    %v2718 = vsel %vm371, %v2688, 0.0
    %v2719 = vadd.f32 %v2717, %v2718
    %v2720 = vsel %vm371, %v2690, 0.0
    %v2721 = vadd.f32 %v2719, %v2720
    %v2722 = vsel %vm371, %v2692, 0.0
    %v2723 = vadd.f32 %v2721, %v2722
    %v2724 = vsel %vm371, %v2694, 0.0
    %v2725 = vadd.f32 %v2723, %v2724
    %v2726 = vsel %vm371, %v2696, 0.0
    %v2727 = vadd.f32 %v2725, %v2726
    %v2728 = vrot.slane %v2727, 4
    %v2729 = vadd.f32 %v2727, %v2728
    %v2730 = vrot.slane %v2729, 2
    %v2731 = vadd.f32 %v2729, %v2730
    %v2732 = vrot.slane %v2731, 1
    %v2733 = vadd.f32 %v2731, %v2732
    %v2734 = vadd.f32 %v2648, %v2733
    %v2735 = vlog2.pop %v2734
    %v2736 = vmul.f32 %v2735, 0.6931472
    %v2737 = vadd.f32 %v2644, %v2736
    %v2738 = vsub.f32 %v2737, %v1833
    %v2739 = vmul.f32 %v2738, %v1803
    %v2740 = vsel %vm1666, %v2739, 0.0
    %2741 = vadd.xlane.f32.xlu0 %v2740
    %v2742 = vpop.xlane.xlu0 %2741
    %v2743 = vrot.slane %v2742, 4
    %v2744 = vadd.f32 %v2742, %v2743
    %v2745 = vrot.slane %v2744, 2
    %v2746 = vadd.f32 %v2744, %v2745
    %v2747 = vrot.slane %v2746, 1
    %v2748 = vadd.f32 %v2746, %v2747
    %s2749 = vtos %v2748
    %v2750 = vstv %s2749
    %v2751 = vadd.f32 %v1678, %v2750
    %v2752 = vsel %vm1666, %v1803, 0.0
    %2753 = vadd.xlane.f32.xlu0 %v2752
    %v2754 = vpop.xlane.xlu0 %2753
    %v2755 = vrot.slane %v2754, 4
    %v2756 = vadd.f32 %v2754, %v2755
    %v2757 = vrot.slane %v2756, 2
    %v2758 = vadd.f32 %v2756, %v2757
    %v2759 = vrot.slane %v2758, 1
    %v2760 = vadd.f32 %v2758, %v2759
    %s2761 = vtos %v2760
    %v2762 = vstv %s2761
    %v2763 = vadd.f32 %v1690, %v2762
    %v2764 = vrcp.pop %v2763
    %v2765 = vmul.f32 %v2751, %v2764
    %vm2766 = vcmask 0
    %2767 = vst.msk [vmem:[#allocation2] sm:$0x1] %vm2766, %v2765
    // Predicated region
    $region22: #{cdc_loss_forward.1} parent=1 // pred_check
      _
    $region23: #{cdc_loss_forward.1} parent=1 // pred_check_branch
      %2769 = sbr.rel (0) target = $region25
    $region24: #{cdc_loss_forward.1} parent=1 // pred_region
      %s2771 = ssub.s32 16, 16
      %2772 = vsyncadd [#allocation3], %s2771
      %s2774 = sshll.u32 [#allocation2], 4
      %s2775 = int_to_ptr.vmem [resolvable:$true] %s2774
      %2777 = dma.vmem_to_hbm [thread:$0]  %s2775, 16, %s5, [#allocation3]
    $region25: #{cdc_loss_forward.1} parent=1 // pred_fallthru
      _
    // Predicated region
    $region26: #{cdc_loss_forward.1} parent=1 // pred_check
      _
    $region27: #{cdc_loss_forward.1} parent=1 // pred_check_branch
      %2779 = sbr.rel (0) target = $region29
    $region28: #{cdc_loss_forward.1} parent=1 // pred_region
      %2780 = dma.done [#allocation3], 16
    $region29: #{cdc_loss_forward.1} parent=1 // pred_fallthru
      _
    %2781 = vsyncpa [#allocation3], 1

</llo_original>
